<compile_context>
chip_gen: v5e
topology: v5e:2x2
jax: 0.10.0
libtpu: 0.0.40
codegen_flags: <defaults>
</compile_context>

<pallas_src>
import jax
import jax.numpy as jnp
from jax.experimental import pallas as pl
from jax.experimental.pallas import tpu as pltpu

EPS = 1e-5


def _conv_bn_relu_kernel(w_ref, x_ref, gb_ref, o_ref, acc_ref):
    k = pl.program_id(1)

    @pl.when(k == 0)
    def _init():
        acc_ref[...] = jnp.zeros_like(acc_ref)

    # 1x1 conv partial product on the MXU: cast to bf16 in-kernel (VPU filler on an
    # HBM-bound kernel), accumulate in f32.
    acc_ref[...] += jnp.dot(
        w_ref[...].astype(jnp.bfloat16),
        x_ref[...].astype(jnp.bfloat16),
        preferred_element_type=jnp.float32,
    )

    @pl.when(k == pl.num_programs(1) - 1)
    def _finalize():
        y = acc_ref[...]                                    # [tco, M] f32
        m = y.shape[1]
        inv_m = 1.0 / m
        # Training-mode BatchNorm2d batch statistics (biased variance) over M per
        # output channel, single pass: var = E[y^2] - mean^2, clamped at 0.
        mean = jnp.sum(y, axis=1, keepdims=True) * inv_m        # [tco, 1]
        mean_sq = jnp.sum(y * y, axis=1, keepdims=True) * inv_m  # [tco, 1]
        var = jnp.maximum(mean_sq - mean * mean, 0.0)

        inv_std = jax.lax.rsqrt(var + EPS)                      # EUP path
        gamma = gb_ref[:, 0:1]
        beta = gb_ref[:, 1:2]
        scale = gamma * inv_std                                 # [tco, 1]
        shift = beta - mean * scale                             # [tco, 1]

        o_ref[...] = jnp.maximum(y * scale + shift, 0.0).astype(o_ref.dtype)


def _pick_tile(total, preferred):
    return preferred if total % preferred == 0 else total


def conv1x1_bn_relu(x_nchw, w_oi, gamma, beta):
    """x_nchw: [N, Cin, H, W]; w_oi: [Cout, Cin] (1x1 conv weight); gamma/beta: [Cout]."""
    N, Cin, H, W = x_nchw.shape
    Cout = w_oi.shape[0]
    M = N * H * W

    # NCHW -> [Cin, N*H*W]. For N == 1 (the module's shape) this transpose only moves a
    # size-1 axis, so it lowers to a free reshape. No dtype cast here -- done in-kernel.
    x2d = jnp.transpose(x_nchw, (1, 0, 2, 3)).reshape(Cin, M)
    w2d = w_oi
    gb = jnp.stack([gamma, beta], axis=1).astype(jnp.float32)   # [Cout, 2]

    tco = _pick_tile(Cout, 128)   # Cout split -> "parallel" (megacore on v7x)
    tk = _pick_tile(Cin, 256)     # Cin split  -> "arbitrary" reduction (DMA/compute overlap)

    out2d = pl.pallas_call(
        _conv_bn_relu_kernel,
        out_shape=jax.ShapeDtypeStruct((Cout, M), x_nchw.dtype),
        grid_spec=pltpu.PrefetchScalarGridSpec(
            num_scalar_prefetch=0,
            grid=(Cout // tco, Cin // tk),
            in_specs=[
                pl.BlockSpec((tco, tk), lambda i, k: (i, k)),   # W
                pl.BlockSpec((tk, M), lambda i, k: (k, 0)),     # X (replicated over Cout blocks)
                pl.BlockSpec((tco, 2), lambda i, k: (i, 0)),    # packed gamma/beta
            ],
            out_specs=pl.BlockSpec((tco, M), lambda i, k: (i, 0)),
            scratch_shapes=[pltpu.VMEM((tco, M), jnp.float32)],
        ),
        compiler_params=pltpu.CompilerParams(
            dimension_semantics=("parallel", "arbitrary"),
            vmem_limit_bytes=32 * 1024 * 1024,   # portable across v5e/v6e/v7x; working set ~3 MiB
        ),
    )(w2d, x2d, gb)

    # [Cout, N*H*W] -> [N, Cout, H, W]; again a free reshape for N == 1.
    return jnp.transpose(out2d.reshape(Cout, N, H, W), (1, 0, 2, 3))


def _reference(x_nchw, w_oi, gamma, beta):
    N, Cin, H, W = x_nchw.shape
    Cout = w_oi.shape[0]
    x2d = jnp.transpose(x_nchw, (0, 2, 3, 1)).reshape(-1, Cin).astype(jnp.float32)
    y = x2d @ jnp.transpose(w_oi, (1, 0)).astype(jnp.float32)
    mean = jnp.mean(y, axis=0, keepdims=True)
    var = jnp.mean((y - mean) ** 2, axis=0, keepdims=True)
    y = (y - mean) / jnp.sqrt(var + EPS) * gamma[None, :] + beta[None, :]
    y = jnp.maximum(y, 0.0)
    return jnp.transpose(y.reshape(N, H, W, Cout), (0, 3, 1, 2)).astype(x_nchw.dtype)


if __name__ == "__main__":
    # Shapes consistent with the module: channels 1024 -> 256, batch 1, spatial 16x16
    # (the real module uses 28x28; 16x16 keeps the test small and lane-aligned).
    N, Cin, Cout, H, W = 1, 1024, 256, 16, 16

    key = jax.random.PRNGKey(0)
    kx, kw, kg, kb = jax.random.split(key, 4)

    x = jax.random.normal(kx, (N, Cin, H, W), dtype=jnp.float32)
    w = jax.random.normal(kw, (Cout, Cin), dtype=jnp.float32) * (1.0 / jnp.sqrt(Cin))
    gamma = 1.0 + 0.1 * jax.random.normal(kg, (Cout,), dtype=jnp.float32)
    beta = 0.1 * jax.random.normal(kb, (Cout,), dtype=jnp.float32)

    out = conv1x1_bn_relu(x, w, gamma, beta)
    out = jax.block_until_ready(out)

    ref = _reference(x, w, gamma, beta)
    assert out.shape == (N, Cout, H, W)
    # bf16 MXU operands with f32 accumulation: tolerance relaxed accordingly.
    assert jnp.allclose(out, ref, atol=2e-2, rtol=2e-2), float(jnp.max(jnp.abs(out - ref)))

    print("KERNEL_OK")
</pallas_src>

<mosaic_0001>
module attributes {stable_mosaic.version = 11 : i64} {
  func.func @_conv_bn_relu_kernel(%arg0: i32, %arg1: i32, %arg2: memref<128x256xf32, #tpu.memory_space<vmem>>, %arg3: memref<256x256xf32, #tpu.memory_space<vmem>>, %arg4: memref<128x2xf32, #tpu.memory_space<vmem>>, %arg5: memref<128x256xf32, #tpu.memory_space<vmem>>, %arg6: memref<128x256xf32, #tpu.memory_space<vmem>>) attributes {dimension_semantics = [#tpu.dimension_semantics<parallel>, #tpu.dimension_semantics<arbitrary>], iteration_bounds = array<i64: 2, 4>, scalar_prefetch = 0 : i64, scratch_operands = 1 : i64, tpu.core_type = #tpu.core_type<tc>, window_params = [{transform_indices = @transform_0, window_bounds = array<i64: 128, 256>}, {transform_indices = @transform_1, window_bounds = array<i64: 256, 256>}, {transform_indices = @transform_2, window_bounds = array<i64: 128, 2>}, {transform_indices = @transform_3, window_bounds = array<i64: 128, 256>}]} {
    %c0_i32 = arith.constant 0 : i32
    %0 = arith.cmpi eq, %arg1, %c0_i32 : i32
    %1 = arith.extui %0 : i1 to i32
    %c0_i32_0 = arith.constant 0 : i32
    %2 = arith.cmpi ne, %1, %c0_i32_0 : i32
    scf.if %2 {
      %cst_9 = arith.constant 0.000000e+00 : f32
      %14 = vector.broadcast %cst_9 : f32 to vector<128x256xf32>
      %c0_10 = arith.constant 0 : index
      %c0_11 = arith.constant 0 : index
      %15 = vector.load %arg6[%c0_10, %c0_11] : memref<128x256xf32, #tpu.memory_space<vmem>>, vector<128x256xf32>
      tpu.vector_store %arg6[%c0_10, %c0_11], %14 {strides = array<i32>} : memref<128x256xf32, #tpu.memory_space<vmem>>, vector<128x256xf32>,
    } else {
    }
    %c0 = arith.constant 0 : index
    %c0_1 = arith.constant 0 : index
    %3 = vector.load %arg6[%c0, %c0_1] : memref<128x256xf32, #tpu.memory_space<vmem>>, vector<128x256xf32>
    %c0_2 = arith.constant 0 : index
    %c0_3 = arith.constant 0 : index
    %4 = vector.load %arg2[%c0_2, %c0_3] : memref<128x256xf32, #tpu.memory_space<vmem>>, vector<128x256xf32>
    %5 = arith.truncf %4 : vector<128x256xf32> to vector<128x256xbf16>
    %c0_4 = arith.constant 0 : index
    %c0_5 = arith.constant 0 : index
    %6 = vector.load %arg3[%c0_4, %c0_5] : memref<256x256xf32, #tpu.memory_space<vmem>>, vector<256x256xf32>
    %7 = arith.truncf %6 : vector<256x256xf32> to vector<256x256xbf16>
    %cst = arith.constant dense<0.000000e+00> : vector<128x256xf32>
    %8 = tpu.matmul %5, %7, %cst {dimension_numbers = #tpu.dot_dimension_numbers<[1], [0], [0], [1], [0, 0, 1, 1], [], []>} : vector<128x256xbf16>, vector<256x256xbf16>, vector<128x256xf32> -> vector<128x256xf32>
    %9 = arith.addf %3, %8 : vector<128x256xf32>
    %c0_6 = arith.constant 0 : index
    %c0_7 = arith.constant 0 : index
    %10 = vector.load %arg6[%c0_6, %c0_7] : memref<128x256xf32, #tpu.memory_space<vmem>>, vector<128x256xf32>
    tpu.vector_store %arg6[%c0_6, %c0_7], %9 {strides = array<i32>} : memref<128x256xf32, #tpu.memory_space<vmem>>, vector<128x256xf32>,
    %c3_i32 = arith.constant 3 : i32
    %11 = arith.cmpi eq, %arg1, %c3_i32 : i32
    %12 = arith.extui %11 : i1 to i32
    %c0_i32_8 = arith.constant 0 : i32
    %13 = arith.cmpi ne, %12, %c0_i32_8 : i32
    scf.if %13 {
      %c0_9 = arith.constant 0 : index
      %c0_10 = arith.constant 0 : index
      %14 = vector.load %arg6[%c0_9, %c0_10] : memref<128x256xf32, #tpu.memory_space<vmem>>, vector<128x256xf32>
      %cst_11 = arith.constant dense<0.000000e+00> : vector<128xf32>
      %15 = vector.multi_reduction <add>, %14, %cst_11 [1] : vector<128x256xf32> to vector<128xf32>
      %16 = vector.shape_cast %15 : vector<128xf32> to vector<128x1xf32>
      %cst_12 = arith.constant 3.906250e-03 : f32
      %17 = vector.broadcast %cst_12 : f32 to vector<128x1xf32>
      %18 = arith.mulf %16, %17 : vector<128x1xf32>
      %19 = arith.mulf %14, %14 : vector<128x256xf32>
      %cst_13 = arith.constant dense<0.000000e+00> : vector<128xf32>
      %20 = vector.multi_reduction <add>, %19, %cst_13 [1] : vector<128x256xf32> to vector<128xf32>
      %21 = vector.shape_cast %20 : vector<128xf32> to vector<128x1xf32>
      %cst_14 = arith.constant 3.906250e-03 : f32
      %22 = vector.broadcast %cst_14 : f32 to vector<128x1xf32>
      %23 = arith.mulf %21, %22 : vector<128x1xf32>
      %24 = arith.mulf %18, %18 : vector<128x1xf32>
      %25 = arith.subf %23, %24 : vector<128x1xf32>
      %cst_15 = arith.constant 0.000000e+00 : f32
      %26 = vector.broadcast %cst_15 : f32 to vector<128x1xf32>
      %27 = arith.maximumf %25, %26 : vector<128x1xf32>
      %cst_16 = arith.constant 9.99999974E-6 : f32
      %28 = vector.broadcast %cst_16 : f32 to vector<128x1xf32>
      %29 = arith.addf %27, %28 : vector<128x1xf32>
      %30 = math.rsqrt %29 : vector<128x1xf32>
      %c0_17 = arith.constant 0 : index
      %c0_18 = arith.constant 0 : index
      %31 = vector.load %arg4[%c0_17, %c0_18] : memref<128x2xf32, #tpu.memory_space<vmem>>, vector<128x1xf32>
      %c0_19 = arith.constant 0 : index
      %c1 = arith.constant 1 : index
      %32 = vector.load %arg4[%c0_19, %c1] : memref<128x2xf32, #tpu.memory_space<vmem>>, vector<128x1xf32>
      %33 = arith.mulf %31, %30 : vector<128x1xf32>
      %34 = arith.mulf %18, %33 : vector<128x1xf32>
      %35 = arith.subf %32, %34 : vector<128x1xf32>
      %36 = vector.broadcast %33 : vector<128x1xf32> to vector<128x256xf32>
      %37 = arith.mulf %14, %36 : vector<128x256xf32>
      %38 = vector.broadcast %35 : vector<128x1xf32> to vector<128x256xf32>
      %39 = arith.addf %37, %38 : vector<128x256xf32>
      %cst_20 = arith.constant 0.000000e+00 : f32
      %40 = vector.broadcast %cst_20 : f32 to vector<128x256xf32>
      %41 = arith.maximumf %39, %40 : vector<128x256xf32>
      %c0_21 = arith.constant 0 : index
      %c0_22 = arith.constant 0 : index
      %42 = vector.load %arg5[%c0_21, %c0_22] : memref<128x256xf32, #tpu.memory_space<vmem>>, vector<128x256xf32>
      tpu.vector_store %arg5[%c0_21, %c0_22], %41 {strides = array<i32>} : memref<128x256xf32, #tpu.memory_space<vmem>>, vector<128x256xf32>,
    } else {
    }
    return
  }
  func.func @transform_0(%arg0: i32, %arg1: i32) -> (i32, i32) {
    %c0_i32 = arith.constant 0 : i32
    return %arg0, %arg1 : i32, i32
  }
  func.func @transform_1(%arg0: i32, %arg1: i32) -> (i32, i32) {
    %c0_i32 = arith.constant 0 : i32
    %c0_i32_0 = arith.constant 0 : i32
    return %arg1, %c0_i32 : i32, i32
  }
  func.func @transform_2(%arg0: i32, %arg1: i32) -> (i32, i32) {
    %c0_i32 = arith.constant 0 : i32
    %c0_i32_0 = arith.constant 0 : i32
    return %arg0, %c0_i32 : i32, i32
  }
  func.func @transform_3(%arg0: i32, %arg1: i32) -> (i32, i32) {
    %c0_i32 = arith.constant 0 : i32
    %c0_i32_0 = arith.constant 0 : i32
    return %arg0, %c0_i32 : i32, i32
  }
}

</mosaic_0001>

<llo_original>
// kernel: tpu_custom_call.1
$region0: #{tpu_custom_call.1}
  #allocation0 [shape = 'u32[]', space=smem, size = 0x4, offset = 0x4, fixed_abs, tag = 'smem constant byte address 0x4 - core index']
  #allocation1 [shape = 'u32[72,128]{1,0:T(1,128)}', space=vmem, size = 0x9000, scoped, tag = 'internal scratch']
  #allocation2 [shape = 'f32[128,256]{1,0:T(8,128)}', space=vmem, size = 0x20000, scoped, tag = 'scratch operand']
  %s0 = inlined_call_operand.hbm [shape: f32[256,1024], index: 0, kind: input, shape index: {}]
  %s1 = inlined_call_operand.hbm [shape: f32[1024,256], index: 1, kind: input, shape index: {}]
  %s2 = inlined_call_operand.vmem [shape: f32[256,2], index: 2, kind: input, shape index: {}]
  %s3 = inlined_call_operand.hbm [shape: f32[256,256], index: 3, kind: output, shape index: {}]
  %s4 = sld [smem:[#allocation0]]
  $region61: #{tpu_custom_call.1} parent=0
    _
  %s6 = ssub.s32 1, %s4
  %s7 = scalar_select 0, %s6, %s4
  $region1: #{tpu_custom_call.1} parent=0
    #allocation3 [shape = 'u8[262144]{0}', space=vmem, size = 0x40000, scoped, tag = 'input window, operand 0']
    #allocation4 [shape = 's32[2]{0}', space=sflag, size = 0x8, scoped, tag = 'scoped memory for tpu_custom_call.1']
    #allocation5 [shape = 's32[2]{0}', space=sflag, size = 0x8, scoped, tag = 'scoped memory for tpu_custom_call.1']
    #allocation6 [shape = 'u8[524288]{0}', space=vmem, size = 0x80000, scoped, tag = 'input window, operand 1']
    #allocation7 [shape = 's32[2]{0}', space=sflag, size = 0x8, scoped, tag = 'scoped memory for tpu_custom_call.1']
    #allocation8 [shape = 'u8[262144]{0}', space=vmem, size = 0x40000, scoped, tag = 'output window, operand 0']
    %8 = vsyncpa [#allocation4], 0
    %s9 = scalar_lea.sflag [#allocation4], 1
    %10 = vsyncpa %s9, 0
    %11 = vsyncpa [#allocation7], 0
    %s12 = scalar_lea.sflag [#allocation7], 1
    %13 = vsyncpa %s12, 0
    %14 = vsyncpa [#allocation5], 0
    %s15 = scalar_lea.sflag [#allocation5], 1
    %16 = vsyncpa %s15, 0
    loop: start=0, step=1, limit=10
    $region2: #{tpu_custom_call.1} parent=1 // loop_pre_header
      _
    $region3: #{tpu_custom_call.1} parent=1 // loop_header
      %s18 = sphi 0, %s22
      %p19 = scmp.ge.s32.totalorder %s18, 10
      %s25 = sphi 0, %s37
      %s26 = sphi 0, %s33
      %s27 = sphi 0, %s25
      %s28 = sphi 0, %s26
      %s29 = sphi 0, %s27
      %s30 = sphi 0, %s28
      %s42 = sphi 0, %s44
      %s45 = sphi 0, %s42
      %s46 = sphi 0, %s45
      %s62 = sphi 0, %s46
      %s68 = sphi 0, %s70
      %s71 = sphi 0, %s68
      %s72 = sphi 0, %s71
      %s88 = sphi 0, %s72
      %s94 = sphi 0, %s96
      %s97 = sphi 0, %s94
      %s98 = sphi 0, %s97
      %s114 = sphi 0, %s98
      %s120 = sphi 0, %s122
      %s123 = sphi 0, %s120
      %s124 = sphi 0, %s123
      %s140 = sphi 0, %s124
    $region4: #{tpu_custom_call.1} parent=1 // loop_header_branch
      %21 = sbr.rel (%p19) target = $region8
    $region5: #{tpu_custom_call.1} parent=1 // loop_body
      %s23 = ssub.s32 %s18, 1
      %s24 = ssub.s32 %s18, 2
      %s31 = sadd.s32 1, %s26
      %p32 = scmp.ge.s32.totalorder %s31, 4
      %s33 = scalar_select %p32, 0, %s31
      %s34 = sadd.s32 1, %s25
      %s35 = scalar_select %p32, %s34, %s25
      %p36 = scmp.ge.s32.totalorder %s35, 2
      %s37 = scalar_select %p36, 0, %s35
      %s38 = ssub.s32 %s25, %s37
      %s39 = ssub.s32 %s26, %s33
      %s40 = sor.u32 %s38, %s39
      %p41 = scmp.eq.s32.totalorder %s40, 0
      %s43 = sadd.s32 %s42, 1
      %s44 = scalar_select %p41, %s42, %s43
      %p47 = pneg %p41
      %p48 = scmp.eq.s32.totalorder %s18, 7
      %p49 = por %p47, %p48
      %p50 = scmp.ne.s32.totalorder %s42, %s45
      %p51 = scmp.eq.s32.totalorder %s18, 0
      %p52 = por %p50, %p51
      %p53 = scmp.ne.s32.totalorder %s42, %s45
      %p54 = scmp.eq.s32.totalorder %s23, 7
      %p55 = por %p53, %p54
      %p56 = scmp.ne.s32.totalorder %s45, %s46
      %p57 = scmp.eq.s32.totalorder %s23, 0
      %p58 = por %p56, %p57
      %p59 = scmp.ne.s32.totalorder %s45, %s46
      %p60 = scmp.eq.s32.totalorder %s24, 7
      %p61 = por %p59, %p60
      %p63 = scmp.ne.s32.totalorder %s46, %s62
      %p64 = scmp.eq.s32.totalorder %s24, 0
      %p65 = por %p63, %p64
      %s66 = ssub.s32 %s26, %s33
      %p67 = scmp.eq.s32.totalorder %s66, 0
      %s69 = sadd.s32 %s68, 1
      %s70 = scalar_select %p67, %s68, %s69
      %p73 = pneg %p67
      %p74 = scmp.eq.s32.totalorder %s18, 7
      %p75 = por %p73, %p74
      %p76 = scmp.ne.s32.totalorder %s68, %s71
      %p77 = scmp.eq.s32.totalorder %s18, 0
      %p78 = por %p76, %p77
      %p79 = scmp.ne.s32.totalorder %s68, %s71
      %p80 = scmp.eq.s32.totalorder %s23, 7
      %p81 = por %p79, %p80
      %p82 = scmp.ne.s32.totalorder %s71, %s72
      %p83 = scmp.eq.s32.totalorder %s23, 0
      %p84 = por %p82, %p83
      %p85 = scmp.ne.s32.totalorder %s71, %s72
      %p86 = scmp.eq.s32.totalorder %s24, 7
      %p87 = por %p85, %p86
      %p89 = scmp.ne.s32.totalorder %s72, %s88
      %p90 = scmp.eq.s32.totalorder %s24, 0
      %p91 = por %p89, %p90
      %s92 = ssub.s32 %s25, %s37
      %p93 = scmp.eq.s32.totalorder %s92, 0
      %s95 = sadd.s32 %s94, 1
      %s96 = scalar_select %p93, %s94, %s95
      %p99 = pneg %p93
      %p100 = scmp.eq.s32.totalorder %s18, 7
      %p101 = por %p99, %p100
      %p102 = scmp.ne.s32.totalorder %s94, %s97
      %p103 = scmp.eq.s32.totalorder %s18, 0
      %p104 = por %p102, %p103
      %p105 = scmp.ne.s32.totalorder %s94, %s97
      %p106 = scmp.eq.s32.totalorder %s23, 7
      %p107 = por %p105, %p106
      %p108 = scmp.ne.s32.totalorder %s97, %s98
      %p109 = scmp.eq.s32.totalorder %s23, 0
      %p110 = por %p108, %p109
      %p111 = scmp.ne.s32.totalorder %s97, %s98
      %p112 = scmp.eq.s32.totalorder %s24, 7
      %p113 = por %p111, %p112
      %p115 = scmp.ne.s32.totalorder %s98, %s114
      %p116 = scmp.eq.s32.totalorder %s24, 0
      %p117 = por %p115, %p116
      %s118 = ssub.s32 %s25, %s37
      %p119 = scmp.eq.s32.totalorder %s118, 0
      %s121 = sadd.s32 %s120, 1
      %s122 = scalar_select %p119, %s120, %s121
      %p125 = pneg %p119
      %p126 = scmp.eq.s32.totalorder %s18, 7
      %p127 = por %p125, %p126
      %p128 = scmp.ne.s32.totalorder %s120, %s123
      %p129 = scmp.eq.s32.totalorder %s18, 0
      %p130 = por %p128, %p129
      %p131 = scmp.ne.s32.totalorder %s120, %s123
      %p132 = scmp.eq.s32.totalorder %s23, 7
      %p133 = por %p131, %p132
      %p134 = scmp.ne.s32.totalorder %s123, %s124
      %p135 = scmp.eq.s32.totalorder %s23, 0
      %p136 = por %p134, %p135
      %p137 = scmp.ne.s32.totalorder %s123, %s124
      %p138 = scmp.eq.s32.totalorder %s24, 7
      %p139 = por %p137, %p138
      %p141 = scmp.ne.s32.totalorder %s124, %s140
      %p142 = scmp.eq.s32.totalorder %s24, 0
      %p143 = por %p141, %p142
      %p144 = scmp.le.s32.totalorder 1, %s18
      %p145 = scmp.lt.s32.totalorder %s18, 9
      %p146 = pnand %p144, %p145
      %p147 = pneg %p146
      // Predicated region
      $region9: #{tpu_custom_call.1} parent=5 // pred_check
        _
      $region10: #{tpu_custom_call.1} parent=5 // pred_check_branch
        %149 = sbr.rel (%p146) target = $region12
      $region11: #{tpu_custom_call.1} parent=5 // pred_region
        %s150 = ssub.s32 %s18, 1
      $region12: #{tpu_custom_call.1} parent=5 // pred_fallthru
        _
      %p151 = scmp.lt.s32.totalorder %s18, 8
      // Predicated region
      $region13: #{tpu_custom_call.1} parent=5 // pred_check
        %p152 = pneg %p151
      $region14: #{tpu_custom_call.1} parent=5 // pred_check_branch
        %154 = sbr.rel (%p152) target = $region16
      $region15: #{tpu_custom_call.1} parent=5 // pred_region
        // Predicated region
        $region17: #{tpu_custom_call.1} parent=15 // pred_check
          %p155 = pneg %p52
        $region18: #{tpu_custom_call.1} parent=15 // pred_check_branch
          %157 = sbr.rel (%p155) target = $region20
        $region19: #{tpu_custom_call.1} parent=15 // pred_region
          %s158 = sand.u32 %s42, 1
          %s159 = scalar_lea.sflag [#allocation4], %s158
          %s160 = sand.u32 %s42, 1
          %s161 = smul.addr %s160, 256
          %s162 = scalar_lea.vmem [#allocation3], %s161
          %s163 = smul.u32 16, %s25
          %s164 = smul.u32 2, %s26
          %166 = vsyncadd %s159, 0
          %s167 = smul.addr %s163, 8
          %s168 = sadd.s32 %s164, %s167
          %s169 = smul.addr %s168, 8
          %s170 = scalar_lea.hbm %s0, %s169
          %s171 = sshll.u32 %s170, 4
          %s172 = int_to_ptr.hbm [resolvable:$true] %s171
          %s173 = sshll.u32 %s162, 4
          %s174 = int_to_ptr.vmem [resolvable:$true] %s173
          %179 = dma.hbm_to_vmem [thread:$0]  %s172, 4096, %s174, %s159, 1024, 256, 16
        $region20: #{tpu_custom_call.1} parent=15 // pred_fallthru
          _
        // Predicated region
        $region21: #{tpu_custom_call.1} parent=15 // pred_check
          %p180 = pneg %p78
        $region22: #{tpu_custom_call.1} parent=15 // pred_check_branch
          %182 = sbr.rel (%p180) target = $region24
        $region23: #{tpu_custom_call.1} parent=15 // pred_region
          %s183 = sand.u32 %s68, 1
          %s184 = scalar_lea.sflag [#allocation7], %s183
          %s185 = sand.u32 %s68, 1
          %s186 = smul.addr %s185, 512
          %s187 = scalar_lea.vmem [#allocation6], %s186
          %s188 = smul.u32 32, %s26
          %190 = vsyncadd %s184, 0
          %s191 = smul.addr %s188, 2
          %s192 = smul.addr %s191, 8
          %s193 = scalar_lea.hbm %s1, %s192
          %s194 = sshll.u32 %s193, 4
          %s195 = int_to_ptr.hbm [resolvable:$true] %s194
          %s196 = sshll.u32 %s187, 4
          %s197 = int_to_ptr.vmem [resolvable:$true] %s196
          %202 = dma.hbm_to_vmem [thread:$0]  %s195, 8192, %s197, %s184, 256, 256, 16
        $region24: #{tpu_custom_call.1} parent=15 // pred_fallthru
          _
        // Predicated region
        $region25: #{tpu_custom_call.1} parent=15 // pred_check
          %p203 = pneg %p104
        $region26: #{tpu_custom_call.1} parent=15 // pred_check_branch
          %205 = sbr.rel (%p203) target = $region28
        $region27: #{tpu_custom_call.1} parent=15 // pred_region
          %s206 = smul.u32 16, %s25
          %p207 = scmp.lt.s32.totalorder %s206, 31
          %s208 = scalar_select %p207, %s206, 31
          %s209 = smul.addr %s208, 8
          %s210 = scalar_lea.vmem %s2, %s209
          %s211 = smul.u32 16, %s25
        $region28: #{tpu_custom_call.1} parent=15 // pred_fallthru
          _
      $region16: #{tpu_custom_call.1} parent=5 // pred_fallthru
        _
      %p212 = scmp.le.s32.totalorder 1, %s18
      %p213 = scmp.lt.s32.totalorder %s18, 9
      %p214 = pnand %p212, %p213
      %p215 = pneg %p214
      // Predicated region
      $region29: #{tpu_custom_call.1} parent=5 // pred_check
        _
      $region30: #{tpu_custom_call.1} parent=5 // pred_check_branch
        %217 = sbr.rel (%p214) target = $region32
      $region31: #{tpu_custom_call.1} parent=5 // pred_region
        %s218 = ssub.s32 %s18, 1
        %s219 = sand.u32 %s45, 1
        %s220 = scalar_lea.sflag [#allocation4], %s219
        %s221 = sand.u32 %s45, 1
        %s222 = smul.addr %s221, 256
        %s223 = scalar_lea.vmem [#allocation3], %s222
        // Predicated region
        $region33: #{tpu_custom_call.1} parent=31 // pred_check
          %p224 = pneg %p58
        $region34: #{tpu_custom_call.1} parent=31 // pred_check_branch
          %226 = sbr.rel (%p224) target = $region36
        $region35: #{tpu_custom_call.1} parent=31 // pred_region
          %228 = dma.done %s220, 4096
        $region36: #{tpu_custom_call.1} parent=31 // pred_fallthru
          _
        %s229 = sand.u32 %s71, 1
        %s230 = scalar_lea.sflag [#allocation7], %s229
        %s231 = sand.u32 %s71, 1
        %s232 = smul.addr %s231, 512
        %s233 = scalar_lea.vmem [#allocation6], %s232
        // Predicated region
        $region37: #{tpu_custom_call.1} parent=31 // pred_check
          %p234 = pneg %p84
        $region38: #{tpu_custom_call.1} parent=31 // pred_check_branch
          %236 = sbr.rel (%p234) target = $region40
        $region39: #{tpu_custom_call.1} parent=31 // pred_region
          %238 = dma.done %s230, 8192
        $region40: #{tpu_custom_call.1} parent=31 // pred_fallthru
          _
        %s239 = sand.u32 %s45, 1
        %s240 = scalar_lea.sflag [#allocation4], %s239
        %s241 = sand.u32 %s45, 1
        %s242 = smul.addr %s241, 256
        %s243 = scalar_lea.vmem [#allocation3], %s242
        %p244 = pneg %p58
        %p245 = pneg %p55
        %s246 = sand.u32 %s71, 1
        %s247 = scalar_lea.sflag [#allocation7], %s246
        %s248 = sand.u32 %s71, 1
        %s249 = smul.addr %s248, 512
        %s250 = scalar_lea.vmem [#allocation6], %s249
        %p251 = pneg %p84
        %p252 = pneg %p81
        %s253 = smul.u32 16, %s27
        %p254 = scmp.lt.s32.totalorder %s253, 31
        %s255 = scalar_select %p254, %s253, 31
        %s256 = smul.addr %s255, 8
        %s257 = scalar_lea.vmem %s2, %s256
        %p258 = pneg %p110
        %p259 = pneg %p107
        %p260 = pneg %p136
        %p261 = pneg %p133
        %s262 = sand.u32 %s123, 1
        %s263 = scalar_lea.sflag [#allocation5], %s262
        %s264 = sand.u32 %s123, 1
        %s265 = smul.addr %s264, 256
        %s266 = scalar_lea.vmem [#allocation8], %s265
        %s267 = smul.u32 16, %s27
        %s268 = smul.u32 2, %s28
        %s269 = smul.u32 32, %s28
        %s270 = smul.u32 16, %s27
        %p271 = scmp.lt.s32.totalorder %s270, 31
        %s272 = scalar_select %p271, %s270, 31
        %s273 = smul.addr %s272, 8
        %s274 = scalar_lea.vmem %s2, %s273
        %s275 = smul.u32 16, %s27
        %s276 = smul.u32 16, %s27
        %p277 = scmp.eq.s32.totalorder %s28, 0
        // Predicated region
        $region41: #{tpu_custom_call.1} parent=31 // pred_check
          %p278 = pneg %p277
        $region42: #{tpu_custom_call.1} parent=31 // pred_check_branch
          %280 = sbr.rel (%p278) target = $region44
        $region43: #{tpu_custom_call.1} parent=31 // pred_region
          %281 = vst [vmem:[#allocation2] sm:$0xff] 0.0
          %282 = vst [vmem:[#allocation2 + $0x8] sm:$0xff] 0.0
          %283 = vst [vmem:[#allocation2 + $0x10] sm:$0xff] 0.0
          %284 = vst [vmem:[#allocation2 + $0x18] sm:$0xff] 0.0
          %285 = vst [vmem:[#allocation2 + $0x20] sm:$0xff] 0.0
          %286 = vst [vmem:[#allocation2 + $0x28] sm:$0xff] 0.0
          %287 = vst [vmem:[#allocation2 + $0x30] sm:$0xff] 0.0
          %288 = vst [vmem:[#allocation2 + $0x38] sm:$0xff] 0.0
          %289 = vst [vmem:[#allocation2 + $0x40] sm:$0xff] 0.0
          %290 = vst [vmem:[#allocation2 + $0x48] sm:$0xff] 0.0
          %291 = vst [vmem:[#allocation2 + $0x50] sm:$0xff] 0.0
          %292 = vst [vmem:[#allocation2 + $0x58] sm:$0xff] 0.0
          %293 = vst [vmem:[#allocation2 + $0x60] sm:$0xff] 0.0
          %294 = vst [vmem:[#allocation2 + $0x68] sm:$0xff] 0.0
          %295 = vst [vmem:[#allocation2 + $0x70] sm:$0xff] 0.0
          %296 = vst [vmem:[#allocation2 + $0x78] sm:$0xff] 0.0
          %297 = vst [vmem:[#allocation2 + $0x80] sm:$0xff] 0.0
          %298 = vst [vmem:[#allocation2 + $0x88] sm:$0xff] 0.0
          %299 = vst [vmem:[#allocation2 + $0x90] sm:$0xff] 0.0
          %300 = vst [vmem:[#allocation2 + $0x98] sm:$0xff] 0.0
          %301 = vst [vmem:[#allocation2 + $0xa0] sm:$0xff] 0.0
          %302 = vst [vmem:[#allocation2 + $0xa8] sm:$0xff] 0.0
          %303 = vst [vmem:[#allocation2 + $0xb0] sm:$0xff] 0.0
          %304 = vst [vmem:[#allocation2 + $0xb8] sm:$0xff] 0.0
          %305 = vst [vmem:[#allocation2 + $0xc0] sm:$0xff] 0.0
          %306 = vst [vmem:[#allocation2 + $0xc8] sm:$0xff] 0.0
          %307 = vst [vmem:[#allocation2 + $0xd0] sm:$0xff] 0.0
          %308 = vst [vmem:[#allocation2 + $0xd8] sm:$0xff] 0.0
          %309 = vst [vmem:[#allocation2 + $0xe0] sm:$0xff] 0.0
          %310 = vst [vmem:[#allocation2 + $0xe8] sm:$0xff] 0.0
          %311 = vst [vmem:[#allocation2 + $0xf0] sm:$0xff] 0.0
          %312 = vst [vmem:[#allocation2 + $0xf8] sm:$0xff] 0.0
        $region44: #{tpu_custom_call.1} parent=31 // pred_fallthru
          _
        %v313 = vld [vmem:[#allocation2] sm:$0xff]
        %v314 = vld [vmem:[#allocation2 + $0x8] sm:$0xff]
        %v315 = vld [vmem:[#allocation2 + $0x10] sm:$0xff]
        %v316 = vld [vmem:[#allocation2 + $0x18] sm:$0xff]
        %v317 = vld [vmem:[#allocation2 + $0x20] sm:$0xff]
        %v318 = vld [vmem:[#allocation2 + $0x28] sm:$0xff]
        %v319 = vld [vmem:[#allocation2 + $0x30] sm:$0xff]
        %v320 = vld [vmem:[#allocation2 + $0x38] sm:$0xff]
        %v321 = vld [vmem:[#allocation2 + $0x40] sm:$0xff]
        %v322 = vld [vmem:[#allocation2 + $0x48] sm:$0xff]
        %v323 = vld [vmem:[#allocation2 + $0x50] sm:$0xff]
        %v324 = vld [vmem:[#allocation2 + $0x58] sm:$0xff]
        %v325 = vld [vmem:[#allocation2 + $0x60] sm:$0xff]
        %v326 = vld [vmem:[#allocation2 + $0x68] sm:$0xff]
        %v327 = vld [vmem:[#allocation2 + $0x70] sm:$0xff]
        %v328 = vld [vmem:[#allocation2 + $0x78] sm:$0xff]
        %v329 = vld [vmem:[#allocation2 + $0x80] sm:$0xff]
        %v330 = vld [vmem:[#allocation2 + $0x88] sm:$0xff]
        %v331 = vld [vmem:[#allocation2 + $0x90] sm:$0xff]
        %v332 = vld [vmem:[#allocation2 + $0x98] sm:$0xff]
        %v333 = vld [vmem:[#allocation2 + $0xa0] sm:$0xff]
        %v334 = vld [vmem:[#allocation2 + $0xa8] sm:$0xff]
        %v335 = vld [vmem:[#allocation2 + $0xb0] sm:$0xff]
        %v336 = vld [vmem:[#allocation2 + $0xb8] sm:$0xff]
        %v337 = vld [vmem:[#allocation2 + $0xc0] sm:$0xff]
        %v338 = vld [vmem:[#allocation2 + $0xc8] sm:$0xff]
        %v339 = vld [vmem:[#allocation2 + $0xd0] sm:$0xff]
        %v340 = vld [vmem:[#allocation2 + $0xd8] sm:$0xff]
        %v341 = vld [vmem:[#allocation2 + $0xe0] sm:$0xff]
        %v342 = vld [vmem:[#allocation2 + $0xe8] sm:$0xff]
        %v343 = vld [vmem:[#allocation2 + $0xf0] sm:$0xff]
        %v344 = vld [vmem:[#allocation2 + $0xf8] sm:$0xff]
        %v345 = vld [vmem:[%s223] sm:$0xff]
        %v346 = vld [vmem:[%s223 + $0x8] sm:$0xff]
        %v347 = vld [vmem:[%s223 + $0x10] sm:$0xff]
        %v348 = vld [vmem:[%s223 + $0x18] sm:$0xff]
        %v349 = vld [vmem:[%s223 + $0x20] sm:$0xff]
        %v350 = vld [vmem:[%s223 + $0x28] sm:$0xff]
        %v351 = vld [vmem:[%s223 + $0x30] sm:$0xff]
        %v352 = vld [vmem:[%s223 + $0x38] sm:$0xff]
        %v353 = vld [vmem:[%s223 + $0x40] sm:$0xff]
        %v354 = vld [vmem:[%s223 + $0x48] sm:$0xff]
        %v355 = vld [vmem:[%s223 + $0x50] sm:$0xff]
        %v356 = vld [vmem:[%s223 + $0x58] sm:$0xff]
        %v357 = vld [vmem:[%s223 + $0x60] sm:$0xff]
        %v358 = vld [vmem:[%s223 + $0x68] sm:$0xff]
        %v359 = vld [vmem:[%s223 + $0x70] sm:$0xff]
        %v360 = vld [vmem:[%s223 + $0x78] sm:$0xff]
        %v361 = vld [vmem:[%s223 + $0x80] sm:$0xff]
        %v362 = vld [vmem:[%s223 + $0x88] sm:$0xff]
        %v363 = vld [vmem:[%s223 + $0x90] sm:$0xff]
        %v364 = vld [vmem:[%s223 + $0x98] sm:$0xff]
        %v365 = vld [vmem:[%s223 + $0xa0] sm:$0xff]
        %v366 = vld [vmem:[%s223 + $0xa8] sm:$0xff]
        %v367 = vld [vmem:[%s223 + $0xb0] sm:$0xff]
        %v368 = vld [vmem:[%s223 + $0xb8] sm:$0xff]
        %v369 = vld [vmem:[%s223 + $0xc0] sm:$0xff]
        %v370 = vld [vmem:[%s223 + $0xc8] sm:$0xff]
        %v371 = vld [vmem:[%s223 + $0xd0] sm:$0xff]
        %v372 = vld [vmem:[%s223 + $0xd8] sm:$0xff]
        %v373 = vld [vmem:[%s223 + $0xe0] sm:$0xff]
        %v374 = vld [vmem:[%s223 + $0xe8] sm:$0xff]
        %v375 = vld [vmem:[%s223 + $0xf0] sm:$0xff]
        %v376 = vld [vmem:[%s223 + $0xf8] sm:$0xff]
        %v377 = vpack.c.bf16 %v347, %v345
        %v378 = vpack.c.bf16 %v348, %v346
        %v379 = vpack.c.bf16 %v351, %v349
        %v380 = vpack.c.bf16 %v352, %v350
        %v381 = vpack.c.bf16 %v355, %v353
        %v382 = vpack.c.bf16 %v356, %v354
        %v383 = vpack.c.bf16 %v359, %v357
        %v384 = vpack.c.bf16 %v360, %v358
        %v385 = vpack.c.bf16 %v363, %v361
        %v386 = vpack.c.bf16 %v364, %v362
        %v387 = vpack.c.bf16 %v367, %v365
        %v388 = vpack.c.bf16 %v368, %v366
        %v389 = vpack.c.bf16 %v371, %v369
        %v390 = vpack.c.bf16 %v372, %v370
        %v391 = vpack.c.bf16 %v375, %v373
        %v392 = vpack.c.bf16 %v376, %v374
        %v393 = vld [vmem:[%s233] sm:$0xff]
        %v394 = vld [vmem:[%s233 + $0x8] sm:$0xff]
        %v395 = vld [vmem:[%s233 + $0x10] sm:$0xff]
        %v396 = vld [vmem:[%s233 + $0x18] sm:$0xff]
        %v397 = vld [vmem:[%s233 + $0x20] sm:$0xff]
        %v398 = vld [vmem:[%s233 + $0x28] sm:$0xff]
        %v399 = vld [vmem:[%s233 + $0x30] sm:$0xff]
        %v400 = vld [vmem:[%s233 + $0x38] sm:$0xff]
        %v401 = vld [vmem:[%s233 + $0x40] sm:$0xff]
        %v402 = vld [vmem:[%s233 + $0x48] sm:$0xff]
        %v403 = vld [vmem:[%s233 + $0x50] sm:$0xff]
        %v404 = vld [vmem:[%s233 + $0x58] sm:$0xff]
        %v405 = vld [vmem:[%s233 + $0x60] sm:$0xff]
        %v406 = vld [vmem:[%s233 + $0x68] sm:$0xff]
        %v407 = vld [vmem:[%s233 + $0x70] sm:$0xff]
        %v408 = vld [vmem:[%s233 + $0x78] sm:$0xff]
        %v409 = vld [vmem:[%s233 + $0x80] sm:$0xff]
        %v410 = vld [vmem:[%s233 + $0x88] sm:$0xff]
        %v411 = vld [vmem:[%s233 + $0x90] sm:$0xff]
        %v412 = vld [vmem:[%s233 + $0x98] sm:$0xff]
        %v413 = vld [vmem:[%s233 + $0xa0] sm:$0xff]
        %v414 = vld [vmem:[%s233 + $0xa8] sm:$0xff]
        %v415 = vld [vmem:[%s233 + $0xb0] sm:$0xff]
        %v416 = vld [vmem:[%s233 + $0xb8] sm:$0xff]
        %v417 = vld [vmem:[%s233 + $0xc0] sm:$0xff]
        %v418 = vld [vmem:[%s233 + $0xc8] sm:$0xff]
        %v419 = vld [vmem:[%s233 + $0xd0] sm:$0xff]
        %v420 = vld [vmem:[%s233 + $0xd8] sm:$0xff]
        %v421 = vld [vmem:[%s233 + $0xe0] sm:$0xff]
        %v422 = vld [vmem:[%s233 + $0xe8] sm:$0xff]
        %v423 = vld [vmem:[%s233 + $0xf0] sm:$0xff]
        %v424 = vld [vmem:[%s233 + $0xf8] sm:$0xff]
        %v425 = vld [vmem:[%s233 + $0x100] sm:$0xff]
        %v426 = vld [vmem:[%s233 + $0x108] sm:$0xff]
        %v427 = vld [vmem:[%s233 + $0x110] sm:$0xff]
        %v428 = vld [vmem:[%s233 + $0x118] sm:$0xff]
        %v429 = vld [vmem:[%s233 + $0x120] sm:$0xff]
        %v430 = vld [vmem:[%s233 + $0x128] sm:$0xff]
        %v431 = vld [vmem:[%s233 + $0x130] sm:$0xff]
        %v432 = vld [vmem:[%s233 + $0x138] sm:$0xff]
        %v433 = vld [vmem:[%s233 + $0x140] sm:$0xff]
        %v434 = vld [vmem:[%s233 + $0x148] sm:$0xff]
        %v435 = vld [vmem:[%s233 + $0x150] sm:$0xff]
        %v436 = vld [vmem:[%s233 + $0x158] sm:$0xff]
        %v437 = vld [vmem:[%s233 + $0x160] sm:$0xff]
        %v438 = vld [vmem:[%s233 + $0x168] sm:$0xff]
        %v439 = vld [vmem:[%s233 + $0x170] sm:$0xff]
        %v440 = vld [vmem:[%s233 + $0x178] sm:$0xff]
        %v441 = vld [vmem:[%s233 + $0x180] sm:$0xff]
        %v442 = vld [vmem:[%s233 + $0x188] sm:$0xff]
        %v443 = vld [vmem:[%s233 + $0x190] sm:$0xff]
        %v444 = vld [vmem:[%s233 + $0x198] sm:$0xff]
        %v445 = vld [vmem:[%s233 + $0x1a0] sm:$0xff]
        %v446 = vld [vmem:[%s233 + $0x1a8] sm:$0xff]
        %v447 = vld [vmem:[%s233 + $0x1b0] sm:$0xff]
        %v448 = vld [vmem:[%s233 + $0x1b8] sm:$0xff]
        %v449 = vld [vmem:[%s233 + $0x1c0] sm:$0xff]
        %v450 = vld [vmem:[%s233 + $0x1c8] sm:$0xff]
        %v451 = vld [vmem:[%s233 + $0x1d0] sm:$0xff]
        %v452 = vld [vmem:[%s233 + $0x1d8] sm:$0xff]
        %v453 = vld [vmem:[%s233 + $0x1e0] sm:$0xff]
        %v454 = vld [vmem:[%s233 + $0x1e8] sm:$0xff]
        %v455 = vld [vmem:[%s233 + $0x1f0] sm:$0xff]
        %v456 = vld [vmem:[%s233 + $0x1f8] sm:$0xff]
        %v457 = vpack.c.bf16 %v395, %v393
        %v458 = vpack.c.bf16 %v396, %v394
        %v459 = vpack.c.bf16 %v399, %v397
        %v460 = vpack.c.bf16 %v400, %v398
        %v461 = vpack.c.bf16 %v403, %v401
        %v462 = vpack.c.bf16 %v404, %v402
        %v463 = vpack.c.bf16 %v407, %v405
        %v464 = vpack.c.bf16 %v408, %v406
        %v465 = vpack.c.bf16 %v411, %v409
        %v466 = vpack.c.bf16 %v412, %v410
        %v467 = vpack.c.bf16 %v415, %v413
        %v468 = vpack.c.bf16 %v416, %v414
        %v469 = vpack.c.bf16 %v419, %v417
        %v470 = vpack.c.bf16 %v420, %v418
        %v471 = vpack.c.bf16 %v423, %v421
        %v472 = vpack.c.bf16 %v424, %v422
        %v473 = vpack.c.bf16 %v427, %v425
        %v474 = vpack.c.bf16 %v428, %v426
        %v475 = vpack.c.bf16 %v431, %v429
        %v476 = vpack.c.bf16 %v432, %v430
        %v477 = vpack.c.bf16 %v435, %v433
        %v478 = vpack.c.bf16 %v436, %v434
        %v479 = vpack.c.bf16 %v439, %v437
        %v480 = vpack.c.bf16 %v440, %v438
        %v481 = vpack.c.bf16 %v443, %v441
        %v482 = vpack.c.bf16 %v444, %v442
        %v483 = vpack.c.bf16 %v447, %v445
        %v484 = vpack.c.bf16 %v448, %v446
        %v485 = vpack.c.bf16 %v451, %v449
        %v486 = vpack.c.bf16 %v452, %v450
        %v487 = vpack.c.bf16 %v455, %v453
        %v488 = vpack.c.bf16 %v456, %v454
        %489 = vmatpush.bf16.msra.mxu0 %v471
        %490 = vmatpush.bf16.msra.mxu0 %v469
        %491 = vmatpush.bf16.msra.mxu0 %v467
        %492 = vmatpush.bf16.msra.mxu0 %v465
        %493 = vmatpush.bf16.msra.mxu0 %v463
        %494 = vmatpush.bf16.msra.mxu0 %v461
        %495 = vmatpush.bf16.msra.mxu0 %v459
        %496 = vmatpush.bf16.msra.mxu0 %v457
        %497 = vmatmul.bf16.gmra.mxu0 %v377
        %v498 = vpop.f32.mrf.mxu0
        %v499 = vadd.f32 0.0, %v498
        %v500 = vpop.f32.mrf.mxu0
        %v501 = vadd.f32 0.0, %v500
        %502 = vmatmul.bf16.gmra.mxu0 %v379
        %v503 = vpop.f32.mrf.mxu0
        %v504 = vadd.f32 0.0, %v503
        %v505 = vpop.f32.mrf.mxu0
        %v506 = vadd.f32 0.0, %v505
        %507 = vmatmul.bf16.gmra.mxu0 %v381
        %v508 = vpop.f32.mrf.mxu0
        %v509 = vadd.f32 0.0, %v508
        %v510 = vpop.f32.mrf.mxu0
        %v511 = vadd.f32 0.0, %v510
        %512 = vmatmul.bf16.gmra.mxu0 %v383
        %v513 = vpop.f32.mrf.mxu0
        %v514 = vadd.f32 0.0, %v513
        %v515 = vpop.f32.mrf.mxu0
        %v516 = vadd.f32 0.0, %v515
        %517 = vmatmul.bf16.gmra.mxu0 %v385
        %v518 = vpop.f32.mrf.mxu0
        %v519 = vadd.f32 0.0, %v518
        %v520 = vpop.f32.mrf.mxu0
        %v521 = vadd.f32 0.0, %v520
        %522 = vmatmul.bf16.gmra.mxu0 %v387
        %v523 = vpop.f32.mrf.mxu0
        %v524 = vadd.f32 0.0, %v523
        %v525 = vpop.f32.mrf.mxu0
        %v526 = vadd.f32 0.0, %v525
        %527 = vmatmul.bf16.gmra.mxu0 %v389
        %v528 = vpop.f32.mrf.mxu0
        %v529 = vadd.f32 0.0, %v528
        %v530 = vpop.f32.mrf.mxu0
        %v531 = vadd.f32 0.0, %v530
        %532 = vmatmul.bf16.gmra.mxu0 %v391
        %v533 = vpop.f32.mrf.mxu0
        %v534 = vadd.f32 0.0, %v533
        %v535 = vpop.f32.mrf.mxu0
        %v536 = vadd.f32 0.0, %v535
        %537 = vdwg.mxu0
        %538 = vmatpush.bf16.msra.mxu0 %v487
        %539 = vmatpush.bf16.msra.mxu0 %v485
        %540 = vmatpush.bf16.msra.mxu0 %v483
        %541 = vmatpush.bf16.msra.mxu0 %v481
        %542 = vmatpush.bf16.msra.mxu0 %v479
        %543 = vmatpush.bf16.msra.mxu0 %v477
        %544 = vmatpush.bf16.msra.mxu0 %v475
        %545 = vmatpush.bf16.msra.mxu0 %v473
        %546 = vmatmul.bf16.gmra.mxu0 %v378
        %v547 = vpop.f32.mrf.mxu0
        %v548 = vadd.f32 %v499, %v547
        %v549 = vpop.f32.mrf.mxu0
        %v550 = vadd.f32 %v501, %v549
        %551 = vmatmul.bf16.gmra.mxu0 %v380
        %v552 = vpop.f32.mrf.mxu0
        %v553 = vadd.f32 %v504, %v552
        %v554 = vpop.f32.mrf.mxu0
        %v555 = vadd.f32 %v506, %v554
        %556 = vmatmul.bf16.gmra.mxu0 %v382
        %v557 = vpop.f32.mrf.mxu0
        %v558 = vadd.f32 %v509, %v557
        %v559 = vpop.f32.mrf.mxu0
        %v560 = vadd.f32 %v511, %v559
        %561 = vmatmul.bf16.gmra.mxu0 %v384
        %v562 = vpop.f32.mrf.mxu0
        %v563 = vadd.f32 %v514, %v562
        %v564 = vpop.f32.mrf.mxu0
        %v565 = vadd.f32 %v516, %v564
        %566 = vmatmul.bf16.gmra.mxu0 %v386
        %v567 = vpop.f32.mrf.mxu0
        %v568 = vadd.f32 %v519, %v567
        %v569 = vpop.f32.mrf.mxu0
        %v570 = vadd.f32 %v521, %v569
        %571 = vmatmul.bf16.gmra.mxu0 %v388
        %v572 = vpop.f32.mrf.mxu0
        %v573 = vadd.f32 %v524, %v572
        %v574 = vpop.f32.mrf.mxu0
        %v575 = vadd.f32 %v526, %v574
        %576 = vmatmul.bf16.gmra.mxu0 %v390
        %v577 = vpop.f32.mrf.mxu0
        %v578 = vadd.f32 %v529, %v577
        %v579 = vpop.f32.mrf.mxu0
        %v580 = vadd.f32 %v531, %v579
        %581 = vmatmul.bf16.gmra.mxu0 %v392
        %v582 = vpop.f32.mrf.mxu0
        %v583 = vadd.f32 %v534, %v582
        %v584 = vpop.f32.mrf.mxu0
        %v585 = vadd.f32 %v536, %v584
        %586 = vdwg.mxu0
        %587 = vmatpush.bf16.msra.mxu0 %v472
        %588 = vmatpush.bf16.msra.mxu0 %v470
        %589 = vmatpush.bf16.msra.mxu0 %v468
        %590 = vmatpush.bf16.msra.mxu0 %v466
        %591 = vmatpush.bf16.msra.mxu0 %v464
        %592 = vmatpush.bf16.msra.mxu0 %v462
        %593 = vmatpush.bf16.msra.mxu0 %v460
        %594 = vmatpush.bf16.msra.mxu0 %v458
        %595 = vmatmul.bf16.gmra.mxu0 %v377
        %v596 = vpop.f32.mrf.mxu0
        %v597 = vadd.f32 0.0, %v596
        %v598 = vpop.f32.mrf.mxu0
        %v599 = vadd.f32 0.0, %v598
        %600 = vmatmul.bf16.gmra.mxu0 %v379
        %v601 = vpop.f32.mrf.mxu0
        %v602 = vadd.f32 0.0, %v601
        %v603 = vpop.f32.mrf.mxu0
        %v604 = vadd.f32 0.0, %v603
        %605 = vmatmul.bf16.gmra.mxu0 %v381
        %v606 = vpop.f32.mrf.mxu0
        %v607 = vadd.f32 0.0, %v606
        %v608 = vpop.f32.mrf.mxu0
        %v609 = vadd.f32 0.0, %v608
        %610 = vmatmul.bf16.gmra.mxu0 %v383
        %v611 = vpop.f32.mrf.mxu0
        %v612 = vadd.f32 0.0, %v611
        %v613 = vpop.f32.mrf.mxu0
        %v614 = vadd.f32 0.0, %v613
        %615 = vmatmul.bf16.gmra.mxu0 %v385
        %v616 = vpop.f32.mrf.mxu0
        %v617 = vadd.f32 0.0, %v616
        %v618 = vpop.f32.mrf.mxu0
        %v619 = vadd.f32 0.0, %v618
        %620 = vmatmul.bf16.gmra.mxu0 %v387
        %v621 = vpop.f32.mrf.mxu0
        %v622 = vadd.f32 0.0, %v621
        %v623 = vpop.f32.mrf.mxu0
        %v624 = vadd.f32 0.0, %v623
        %625 = vmatmul.bf16.gmra.mxu0 %v389
        %v626 = vpop.f32.mrf.mxu0
        %v627 = vadd.f32 0.0, %v626
        %v628 = vpop.f32.mrf.mxu0
        %v629 = vadd.f32 0.0, %v628
        %630 = vmatmul.bf16.gmra.mxu0 %v391
        %v631 = vpop.f32.mrf.mxu0
        %v632 = vadd.f32 0.0, %v631
        %v633 = vpop.f32.mrf.mxu0
        %v634 = vadd.f32 0.0, %v633
        %635 = vdwg.mxu0
        %636 = vmatpush.bf16.msra.mxu0 %v488
        %637 = vmatpush.bf16.msra.mxu0 %v486
        %638 = vmatpush.bf16.msra.mxu0 %v484
        %639 = vmatpush.bf16.msra.mxu0 %v482
        %640 = vmatpush.bf16.msra.mxu0 %v480
        %641 = vmatpush.bf16.msra.mxu0 %v478
        %642 = vmatpush.bf16.msra.mxu0 %v476
        %643 = vmatpush.bf16.msra.mxu0 %v474
        %644 = vmatmul.bf16.gmra.mxu0 %v378
        %v645 = vpop.f32.mrf.mxu0
        %v646 = vadd.f32 %v597, %v645
        %v647 = vpop.f32.mrf.mxu0
        %v648 = vadd.f32 %v599, %v647
        %649 = vmatmul.bf16.gmra.mxu0 %v380
        %v650 = vpop.f32.mrf.mxu0
        %v651 = vadd.f32 %v602, %v650
        %v652 = vpop.f32.mrf.mxu0
        %v653 = vadd.f32 %v604, %v652
        %654 = vmatmul.bf16.gmra.mxu0 %v382
        %v655 = vpop.f32.mrf.mxu0
        %v656 = vadd.f32 %v607, %v655
        %v657 = vpop.f32.mrf.mxu0
        %v658 = vadd.f32 %v609, %v657
        %659 = vmatmul.bf16.gmra.mxu0 %v384
        %v660 = vpop.f32.mrf.mxu0
        %v661 = vadd.f32 %v612, %v660
        %v662 = vpop.f32.mrf.mxu0
        %v663 = vadd.f32 %v614, %v662
        %664 = vmatmul.bf16.gmra.mxu0 %v386
        %v665 = vpop.f32.mrf.mxu0
        %v666 = vadd.f32 %v617, %v665
        %v667 = vpop.f32.mrf.mxu0
        %v668 = vadd.f32 %v619, %v667
        %669 = vmatmul.bf16.gmra.mxu0 %v388
        %v670 = vpop.f32.mrf.mxu0
        %v671 = vadd.f32 %v622, %v670
        %v672 = vpop.f32.mrf.mxu0
        %v673 = vadd.f32 %v624, %v672
        %674 = vmatmul.bf16.gmra.mxu0 %v390
        %v675 = vpop.f32.mrf.mxu0
        %v676 = vadd.f32 %v627, %v675
        %v677 = vpop.f32.mrf.mxu0
        %v678 = vadd.f32 %v629, %v677
        %679 = vmatmul.bf16.gmra.mxu0 %v392
        %v680 = vpop.f32.mrf.mxu0
        %v681 = vadd.f32 %v632, %v680
        %v682 = vpop.f32.mrf.mxu0
        %v683 = vadd.f32 %v634, %v682
        %684 = vdwg.mxu0
        %v685 = vadd.f32 %v313, %v548
        %v686 = vadd.f32 %v314, %v646
        %v687 = vadd.f32 %v315, %v550
        %v688 = vadd.f32 %v316, %v648
        %v689 = vadd.f32 %v317, %v553
        %v690 = vadd.f32 %v318, %v651
        %v691 = vadd.f32 %v319, %v555
        %v692 = vadd.f32 %v320, %v653
        %v693 = vadd.f32 %v321, %v558
        %v694 = vadd.f32 %v322, %v656
        %v695 = vadd.f32 %v323, %v560
        %v696 = vadd.f32 %v324, %v658
        %v697 = vadd.f32 %v325, %v563
        %v698 = vadd.f32 %v326, %v661
        %v699 = vadd.f32 %v327, %v565
        %v700 = vadd.f32 %v328, %v663
        %v701 = vadd.f32 %v329, %v568
        %v702 = vadd.f32 %v330, %v666
        %v703 = vadd.f32 %v331, %v570
        %v704 = vadd.f32 %v332, %v668
        %v705 = vadd.f32 %v333, %v573
        %v706 = vadd.f32 %v334, %v671
        %v707 = vadd.f32 %v335, %v575
        %v708 = vadd.f32 %v336, %v673
        %v709 = vadd.f32 %v337, %v578
        %v710 = vadd.f32 %v338, %v676
        %v711 = vadd.f32 %v339, %v580
        %v712 = vadd.f32 %v340, %v678
        %v713 = vadd.f32 %v341, %v583
        %v714 = vadd.f32 %v342, %v681
        %v715 = vadd.f32 %v343, %v585
        %v716 = vadd.f32 %v344, %v683
        %717 = vst [vmem:[#allocation2] sm:$0xff] %v685
        %718 = vst [vmem:[#allocation2 + $0x8] sm:$0xff] %v686
        %719 = vst [vmem:[#allocation2 + $0x10] sm:$0xff] %v687
        %720 = vst [vmem:[#allocation2 + $0x18] sm:$0xff] %v688
        %721 = vst [vmem:[#allocation2 + $0x20] sm:$0xff] %v689
        %722 = vst [vmem:[#allocation2 + $0x28] sm:$0xff] %v690
        %723 = vst [vmem:[#allocation2 + $0x30] sm:$0xff] %v691
        %724 = vst [vmem:[#allocation2 + $0x38] sm:$0xff] %v692
        %725 = vst [vmem:[#allocation2 + $0x40] sm:$0xff] %v693
        %726 = vst [vmem:[#allocation2 + $0x48] sm:$0xff] %v694
        %727 = vst [vmem:[#allocation2 + $0x50] sm:$0xff] %v695
        %728 = vst [vmem:[#allocation2 + $0x58] sm:$0xff] %v696
        %729 = vst [vmem:[#allocation2 + $0x60] sm:$0xff] %v697
        %730 = vst [vmem:[#allocation2 + $0x68] sm:$0xff] %v698
        %731 = vst [vmem:[#allocation2 + $0x70] sm:$0xff] %v699
        %732 = vst [vmem:[#allocation2 + $0x78] sm:$0xff] %v700
        %733 = vst [vmem:[#allocation2 + $0x80] sm:$0xff] %v701
        %734 = vst [vmem:[#allocation2 + $0x88] sm:$0xff] %v702
        %735 = vst [vmem:[#allocation2 + $0x90] sm:$0xff] %v703
        %736 = vst [vmem:[#allocation2 + $0x98] sm:$0xff] %v704
        %737 = vst [vmem:[#allocation2 + $0xa0] sm:$0xff] %v705
        %738 = vst [vmem:[#allocation2 + $0xa8] sm:$0xff] %v706
        %739 = vst [vmem:[#allocation2 + $0xb0] sm:$0xff] %v707
        %740 = vst [vmem:[#allocation2 + $0xb8] sm:$0xff] %v708
        %741 = vst [vmem:[#allocation2 + $0xc0] sm:$0xff] %v709
        %742 = vst [vmem:[#allocation2 + $0xc8] sm:$0xff] %v710
        %743 = vst [vmem:[#allocation2 + $0xd0] sm:$0xff] %v711
        %744 = vst [vmem:[#allocation2 + $0xd8] sm:$0xff] %v712
        %745 = vst [vmem:[#allocation2 + $0xe0] sm:$0xff] %v713
        %746 = vst [vmem:[#allocation2 + $0xe8] sm:$0xff] %v714
        %747 = vst [vmem:[#allocation2 + $0xf0] sm:$0xff] %v715
        %748 = vst [vmem:[#allocation2 + $0xf8] sm:$0xff] %v716
        %p749 = scmp.eq.s32.totalorder %s28, 3
        // Predicated region
        $region45: #{tpu_custom_call.1} parent=31 // pred_check
          %p750 = pneg %p749
        $region46: #{tpu_custom_call.1} parent=31 // pred_check_branch
          %752 = sbr.rel (%p750) target = $region48
        $region47: #{tpu_custom_call.1} parent=31 // pred_region
          %v753 = vld [vmem:[#allocation2] sm:$0xff]
          %v754 = vld [vmem:[#allocation2 + $0x8] sm:$0xff]
          %v755 = vld [vmem:[#allocation2 + $0x10] sm:$0xff]
          %v756 = vld [vmem:[#allocation2 + $0x18] sm:$0xff]
          %v757 = vld [vmem:[#allocation2 + $0x20] sm:$0xff]
          %v758 = vld [vmem:[#allocation2 + $0x28] sm:$0xff]
          %v759 = vld [vmem:[#allocation2 + $0x30] sm:$0xff]
          %v760 = vld [vmem:[#allocation2 + $0x38] sm:$0xff]
          %v761 = vld [vmem:[#allocation2 + $0x40] sm:$0xff]
          %v762 = vld [vmem:[#allocation2 + $0x48] sm:$0xff]
          %v763 = vld [vmem:[#allocation2 + $0x50] sm:$0xff]
          %v764 = vld [vmem:[#allocation2 + $0x58] sm:$0xff]
          %v765 = vld [vmem:[#allocation2 + $0x60] sm:$0xff]
          %v766 = vld [vmem:[#allocation2 + $0x68] sm:$0xff]
          %v767 = vld [vmem:[#allocation2 + $0x70] sm:$0xff]
          %v768 = vld [vmem:[#allocation2 + $0x78] sm:$0xff]
          %v769 = vld [vmem:[#allocation2 + $0x80] sm:$0xff]
          %v770 = vld [vmem:[#allocation2 + $0x88] sm:$0xff]
          %v771 = vld [vmem:[#allocation2 + $0x90] sm:$0xff]
          %v772 = vld [vmem:[#allocation2 + $0x98] sm:$0xff]
          %v773 = vld [vmem:[#allocation2 + $0xa0] sm:$0xff]
          %v774 = vld [vmem:[#allocation2 + $0xa8] sm:$0xff]
          %v775 = vld [vmem:[#allocation2 + $0xb0] sm:$0xff]
          %v776 = vld [vmem:[#allocation2 + $0xb8] sm:$0xff]
          %v777 = vld [vmem:[#allocation2 + $0xc0] sm:$0xff]
          %v778 = vld [vmem:[#allocation2 + $0xc8] sm:$0xff]
          %v779 = vld [vmem:[#allocation2 + $0xd0] sm:$0xff]
          %v780 = vld [vmem:[#allocation2 + $0xd8] sm:$0xff]
          %v781 = vld [vmem:[#allocation2 + $0xe0] sm:$0xff]
          %v782 = vld [vmem:[#allocation2 + $0xe8] sm:$0xff]
          %v783 = vld [vmem:[#allocation2 + $0xf0] sm:$0xff]
          %v784 = vld [vmem:[#allocation2 + $0xf8] sm:$0xff]
          %v785 = vadd.f32 %v753, %v754
          %786 = vadd.xlane.f32.xlu0 %v785
          %v787 = vpop.xlane.xlu0 %786
          %v788 = vadd.f32 %v755, %v756
          %789 = vadd.xlane.f32.xlu0 %v788
          %v790 = vpop.xlane.xlu0 %789
          %v791 = vadd.f32 %v757, %v758
          %792 = vadd.xlane.f32.xlu0 %v791
          %v793 = vpop.xlane.xlu0 %792
          %v794 = vadd.f32 %v759, %v760
          %795 = vadd.xlane.f32.xlu0 %v794
          %v796 = vpop.xlane.xlu0 %795
          %v797 = vadd.f32 %v761, %v762
          %798 = vadd.xlane.f32.xlu0 %v797
          %v799 = vpop.xlane.xlu0 %798
          %v800 = vadd.f32 %v763, %v764
          %801 = vadd.xlane.f32.xlu0 %v800
          %v802 = vpop.xlane.xlu0 %801
          %v803 = vadd.f32 %v765, %v766
          %804 = vadd.xlane.f32.xlu0 %v803
          %v805 = vpop.xlane.xlu0 %804
          %v806 = vadd.f32 %v767, %v768
          %807 = vadd.xlane.f32.xlu0 %v806
          %v808 = vpop.xlane.xlu0 %807
          %v809 = vadd.f32 %v769, %v770
          %810 = vadd.xlane.f32.xlu0 %v809
          %v811 = vpop.xlane.xlu0 %810
          %v812 = vadd.f32 %v771, %v772
          %813 = vadd.xlane.f32.xlu0 %v812
          %v814 = vpop.xlane.xlu0 %813
          %v815 = vadd.f32 %v773, %v774
          %816 = vadd.xlane.f32.xlu0 %v815
          %v817 = vpop.xlane.xlu0 %816
          %v818 = vadd.f32 %v775, %v776
          %819 = vadd.xlane.f32.xlu0 %v818
          %v820 = vpop.xlane.xlu0 %819
          %v821 = vadd.f32 %v777, %v778
          %822 = vadd.xlane.f32.xlu0 %v821
          %v823 = vpop.xlane.xlu0 %822
          %v824 = vadd.f32 %v779, %v780
          %825 = vadd.xlane.f32.xlu0 %v824
          %v826 = vpop.xlane.xlu0 %825
          %v827 = vadd.f32 %v781, %v782
          %828 = vadd.xlane.f32.xlu0 %v827
          %v829 = vpop.xlane.xlu0 %828
          %v830 = vadd.f32 %v783, %v784
          %831 = vadd.xlane.f32.xlu0 %v830
          %v832 = vpop.xlane.xlu0 %831
          %v833 = vmul.f32 %v787, 0.00390625
          %v834 = vmul.f32 %v790, 0.00390625
          %v835 = vmul.f32 %v793, 0.00390625
          %v836 = vmul.f32 %v796, 0.00390625
          %v837 = vmul.f32 %v799, 0.00390625
          %v838 = vmul.f32 %v802, 0.00390625
          %v839 = vmul.f32 %v805, 0.00390625
          %v840 = vmul.f32 %v808, 0.00390625
          %v841 = vmul.f32 %v811, 0.00390625
          %v842 = vmul.f32 %v814, 0.00390625
          %v843 = vmul.f32 %v817, 0.00390625
          %v844 = vmul.f32 %v820, 0.00390625
          %v845 = vmul.f32 %v823, 0.00390625
          %v846 = vmul.f32 %v826, 0.00390625
          %v847 = vmul.f32 %v829, 0.00390625
          %v848 = vmul.f32 %v832, 0.00390625
          %v849 = vmul.f32 %v753, %v753
          %v850 = vmul.f32 %v754, %v754
          %v851 = vmul.f32 %v755, %v755
          %v852 = vmul.f32 %v756, %v756
          %v853 = vmul.f32 %v757, %v757
          %v854 = vmul.f32 %v758, %v758
          %v855 = vmul.f32 %v759, %v759
          %v856 = vmul.f32 %v760, %v760
          %v857 = vmul.f32 %v761, %v761
          %v858 = vmul.f32 %v762, %v762
          %v859 = vmul.f32 %v763, %v763
          %v860 = vmul.f32 %v764, %v764
          %v861 = vmul.f32 %v765, %v765
          %v862 = vmul.f32 %v766, %v766
          %v863 = vmul.f32 %v767, %v767
          %v864 = vmul.f32 %v768, %v768
          %v865 = vmul.f32 %v769, %v769
          %v866 = vmul.f32 %v770, %v770
          %v867 = vmul.f32 %v771, %v771
          %v868 = vmul.f32 %v772, %v772
          %v869 = vmul.f32 %v773, %v773
          %v870 = vmul.f32 %v774, %v774
          %v871 = vmul.f32 %v775, %v775
          %v872 = vmul.f32 %v776, %v776
          %v873 = vmul.f32 %v777, %v777
          %v874 = vmul.f32 %v778, %v778
          %v875 = vmul.f32 %v779, %v779
          %v876 = vmul.f32 %v780, %v780
          %v877 = vmul.f32 %v781, %v781
          %v878 = vmul.f32 %v782, %v782
          %v879 = vmul.f32 %v783, %v783
          %v880 = vmul.f32 %v784, %v784
          %v881 = vadd.f32 %v849, %v850
          %882 = vadd.xlane.f32.xlu0 %v881
          %v883 = vpop.xlane.xlu0 %882
          %v884 = vadd.f32 %v851, %v852
          %885 = vadd.xlane.f32.xlu0 %v884
          %v886 = vpop.xlane.xlu0 %885
          %v887 = vadd.f32 %v853, %v854
          %888 = vadd.xlane.f32.xlu0 %v887
          %v889 = vpop.xlane.xlu0 %888
          %v890 = vadd.f32 %v855, %v856
          %891 = vadd.xlane.f32.xlu0 %v890
          %v892 = vpop.xlane.xlu0 %891
          %v893 = vadd.f32 %v857, %v858
          %894 = vadd.xlane.f32.xlu0 %v893
          %v895 = vpop.xlane.xlu0 %894
          %v896 = vadd.f32 %v859, %v860
          %897 = vadd.xlane.f32.xlu0 %v896
          %v898 = vpop.xlane.xlu0 %897
          %v899 = vadd.f32 %v861, %v862
          %900 = vadd.xlane.f32.xlu0 %v899
          %v901 = vpop.xlane.xlu0 %900
          %v902 = vadd.f32 %v863, %v864
          %903 = vadd.xlane.f32.xlu0 %v902
          %v904 = vpop.xlane.xlu0 %903
          %v905 = vadd.f32 %v865, %v866
          %906 = vadd.xlane.f32.xlu0 %v905
          %v907 = vpop.xlane.xlu0 %906
          %v908 = vadd.f32 %v867, %v868
          %909 = vadd.xlane.f32.xlu0 %v908
          %v910 = vpop.xlane.xlu0 %909
          %v911 = vadd.f32 %v869, %v870
          %912 = vadd.xlane.f32.xlu0 %v911
          %v913 = vpop.xlane.xlu0 %912
          %v914 = vadd.f32 %v871, %v872
          %915 = vadd.xlane.f32.xlu0 %v914
          %v916 = vpop.xlane.xlu0 %915
          %v917 = vadd.f32 %v873, %v874
          %918 = vadd.xlane.f32.xlu0 %v917
          %v919 = vpop.xlane.xlu0 %918
          %v920 = vadd.f32 %v875, %v876
          %921 = vadd.xlane.f32.xlu0 %v920
          %v922 = vpop.xlane.xlu0 %921
          %v923 = vadd.f32 %v877, %v878
          %924 = vadd.xlane.f32.xlu0 %v923
          %v925 = vpop.xlane.xlu0 %924
          %v926 = vadd.f32 %v879, %v880
          %927 = vadd.xlane.f32.xlu0 %v926
          %v928 = vpop.xlane.xlu0 %927
          %v929 = vmul.f32 %v883, 0.00390625
          %v930 = vmul.f32 %v886, 0.00390625
          %v931 = vmul.f32 %v889, 0.00390625
          %v932 = vmul.f32 %v892, 0.00390625
          %v933 = vmul.f32 %v895, 0.00390625
          %v934 = vmul.f32 %v898, 0.00390625
          %v935 = vmul.f32 %v901, 0.00390625
          %v936 = vmul.f32 %v904, 0.00390625
          %v937 = vmul.f32 %v907, 0.00390625
          %v938 = vmul.f32 %v910, 0.00390625
          %v939 = vmul.f32 %v913, 0.00390625
          %v940 = vmul.f32 %v916, 0.00390625
          %v941 = vmul.f32 %v919, 0.00390625
          %v942 = vmul.f32 %v922, 0.00390625
          %v943 = vmul.f32 %v925, 0.00390625
          %v944 = vmul.f32 %v928, 0.00390625
          %v945 = vmul.f32 %v833, %v833
          %v946 = vmul.f32 %v834, %v834
          %v947 = vmul.f32 %v835, %v835
          %v948 = vmul.f32 %v836, %v836
          %v949 = vmul.f32 %v837, %v837
          %v950 = vmul.f32 %v838, %v838
          %v951 = vmul.f32 %v839, %v839
          %v952 = vmul.f32 %v840, %v840
          %v953 = vmul.f32 %v841, %v841
          %v954 = vmul.f32 %v842, %v842
          %v955 = vmul.f32 %v843, %v843
          %v956 = vmul.f32 %v844, %v844
          %v957 = vmul.f32 %v845, %v845
          %v958 = vmul.f32 %v846, %v846
          %v959 = vmul.f32 %v847, %v847
          %v960 = vmul.f32 %v848, %v848
          %v961 = vsub.f32 %v929, %v945
          %v962 = vsub.f32 %v930, %v946
          %v963 = vsub.f32 %v931, %v947
          %v964 = vsub.f32 %v932, %v948
          %v965 = vsub.f32 %v933, %v949
          %v966 = vsub.f32 %v934, %v950
          %v967 = vsub.f32 %v935, %v951
          %v968 = vsub.f32 %v936, %v952
          %v969 = vsub.f32 %v937, %v953
          %v970 = vsub.f32 %v938, %v954
          %v971 = vsub.f32 %v939, %v955
          %v972 = vsub.f32 %v940, %v956
          %v973 = vsub.f32 %v941, %v957
          %v974 = vsub.f32 %v942, %v958
          %v975 = vsub.f32 %v943, %v959
          %v976 = vsub.f32 %v944, %v960
          %v977 = vmax.f32 %v961, 0.0
          %v978 = vmax.f32 %v962, 0.0
          %v979 = vmax.f32 %v963, 0.0
          %v980 = vmax.f32 %v964, 0.0
          %v981 = vmax.f32 %v965, 0.0
          %v982 = vmax.f32 %v966, 0.0
          %v983 = vmax.f32 %v967, 0.0
          %v984 = vmax.f32 %v968, 0.0
          %v985 = vmax.f32 %v969, 0.0
          %v986 = vmax.f32 %v970, 0.0
          %v987 = vmax.f32 %v971, 0.0
          %v988 = vmax.f32 %v972, 0.0
          %v989 = vmax.f32 %v973, 0.0
          %v990 = vmax.f32 %v974, 0.0
          %v991 = vmax.f32 %v975, 0.0
          %v992 = vmax.f32 %v976, 0.0
          %v993 = vadd.f32 %v977, 1e-05
          %v994 = vadd.f32 %v978, 1e-05
          %v995 = vadd.f32 %v979, 1e-05
          %v996 = vadd.f32 %v980, 1e-05
          %v997 = vadd.f32 %v981, 1e-05
          %v998 = vadd.f32 %v982, 1e-05
          %v999 = vadd.f32 %v983, 1e-05
          %v1000 = vadd.f32 %v984, 1e-05
          %v1001 = vadd.f32 %v985, 1e-05
          %v1002 = vadd.f32 %v986, 1e-05
          %v1003 = vadd.f32 %v987, 1e-05
          %v1004 = vadd.f32 %v988, 1e-05
          %v1005 = vadd.f32 %v989, 1e-05
          %v1006 = vadd.f32 %v990, 1e-05
          %v1007 = vadd.f32 %v991, 1e-05
          %v1008 = vadd.f32 %v992, 1e-05
          %v1009 = vrsqrt.pop %v993
          %v1010 = vmul.f32 %v1009, %v993
          %v1011 = vmul.f32 %v1010, %v1009
          %v1012 = vmul.f32 0.5, %v1011
          %v1013 = vsub.f32 1.5, %v1012
          %v1014 = vmul.f32 %v1009, %v1013
          %vm1015 = vweird.f32 %v993
          %vm1016 = vweird.f32 %v1009
          %vm1017 = vmor %vm1015, %vm1016
          %v1018 = vsel %vm1017, %v1009, %v1014
          %v1019 = vrsqrt.pop %v994
          %v1020 = vmul.f32 %v1019, %v994
          %v1021 = vmul.f32 %v1020, %v1019
          %v1022 = vmul.f32 0.5, %v1021
          %v1023 = vsub.f32 1.5, %v1022
          %v1024 = vmul.f32 %v1019, %v1023
          %vm1025 = vweird.f32 %v994
          %vm1026 = vweird.f32 %v1019
          %vm1027 = vmor %vm1025, %vm1026
          %v1028 = vsel %vm1027, %v1019, %v1024
          %v1029 = vrsqrt.pop %v995
          %v1030 = vmul.f32 %v1029, %v995
          %v1031 = vmul.f32 %v1030, %v1029
          %v1032 = vmul.f32 0.5, %v1031
          %v1033 = vsub.f32 1.5, %v1032
          %v1034 = vmul.f32 %v1029, %v1033
          %vm1035 = vweird.f32 %v995
          %vm1036 = vweird.f32 %v1029
          %vm1037 = vmor %vm1035, %vm1036
          %v1038 = vsel %vm1037, %v1029, %v1034
          %v1039 = vrsqrt.pop %v996
          %v1040 = vmul.f32 %v1039, %v996
          %v1041 = vmul.f32 %v1040, %v1039
          %v1042 = vmul.f32 0.5, %v1041
          %v1043 = vsub.f32 1.5, %v1042
          %v1044 = vmul.f32 %v1039, %v1043
          %vm1045 = vweird.f32 %v996
          %vm1046 = vweird.f32 %v1039
          %vm1047 = vmor %vm1045, %vm1046
          %v1048 = vsel %vm1047, %v1039, %v1044
          %v1049 = vrsqrt.pop %v997
          %v1050 = vmul.f32 %v1049, %v997
          %v1051 = vmul.f32 %v1050, %v1049
          %v1052 = vmul.f32 0.5, %v1051
          %v1053 = vsub.f32 1.5, %v1052
          %v1054 = vmul.f32 %v1049, %v1053
          %vm1055 = vweird.f32 %v997
          %vm1056 = vweird.f32 %v1049
          %vm1057 = vmor %vm1055, %vm1056
          %v1058 = vsel %vm1057, %v1049, %v1054
          %v1059 = vrsqrt.pop %v998
          %v1060 = vmul.f32 %v1059, %v998
          %v1061 = vmul.f32 %v1060, %v1059
          %v1062 = vmul.f32 0.5, %v1061
          %v1063 = vsub.f32 1.5, %v1062
          %v1064 = vmul.f32 %v1059, %v1063
          %vm1065 = vweird.f32 %v998
          %vm1066 = vweird.f32 %v1059
          %vm1067 = vmor %vm1065, %vm1066
          %v1068 = vsel %vm1067, %v1059, %v1064
          %v1069 = vrsqrt.pop %v999
          %v1070 = vmul.f32 %v1069, %v999
          %v1071 = vmul.f32 %v1070, %v1069
          %v1072 = vmul.f32 0.5, %v1071
          %v1073 = vsub.f32 1.5, %v1072
          %v1074 = vmul.f32 %v1069, %v1073
          %vm1075 = vweird.f32 %v999
          %vm1076 = vweird.f32 %v1069
          %vm1077 = vmor %vm1075, %vm1076
          %v1078 = vsel %vm1077, %v1069, %v1074
          %v1079 = vrsqrt.pop %v1000
          %v1080 = vmul.f32 %v1079, %v1000
          %v1081 = vmul.f32 %v1080, %v1079
          %v1082 = vmul.f32 0.5, %v1081
          %v1083 = vsub.f32 1.5, %v1082
          %v1084 = vmul.f32 %v1079, %v1083
          %vm1085 = vweird.f32 %v1000
          %vm1086 = vweird.f32 %v1079
          %vm1087 = vmor %vm1085, %vm1086
          %v1088 = vsel %vm1087, %v1079, %v1084
          %v1089 = vrsqrt.pop %v1001
          %v1090 = vmul.f32 %v1089, %v1001
          %v1091 = vmul.f32 %v1090, %v1089
          %v1092 = vmul.f32 0.5, %v1091
          %v1093 = vsub.f32 1.5, %v1092
          %v1094 = vmul.f32 %v1089, %v1093
          %vm1095 = vweird.f32 %v1001
          %vm1096 = vweird.f32 %v1089
          %vm1097 = vmor %vm1095, %vm1096
          %v1098 = vsel %vm1097, %v1089, %v1094
          %v1099 = vrsqrt.pop %v1002
          %v1100 = vmul.f32 %v1099, %v1002
          %v1101 = vmul.f32 %v1100, %v1099
          %v1102 = vmul.f32 0.5, %v1101
          %v1103 = vsub.f32 1.5, %v1102
          %v1104 = vmul.f32 %v1099, %v1103
          %vm1105 = vweird.f32 %v1002
          %vm1106 = vweird.f32 %v1099
          %vm1107 = vmor %vm1105, %vm1106
          %v1108 = vsel %vm1107, %v1099, %v1104
          %v1109 = vrsqrt.pop %v1003
          %v1110 = vmul.f32 %v1109, %v1003
          %v1111 = vmul.f32 %v1110, %v1109
          %v1112 = vmul.f32 0.5, %v1111
          %v1113 = vsub.f32 1.5, %v1112
          %v1114 = vmul.f32 %v1109, %v1113
          %vm1115 = vweird.f32 %v1003
          %vm1116 = vweird.f32 %v1109
          %vm1117 = vmor %vm1115, %vm1116
          %v1118 = vsel %vm1117, %v1109, %v1114
          %v1119 = vrsqrt.pop %v1004
          %v1120 = vmul.f32 %v1119, %v1004
          %v1121 = vmul.f32 %v1120, %v1119
          %v1122 = vmul.f32 0.5, %v1121
          %v1123 = vsub.f32 1.5, %v1122
          %v1124 = vmul.f32 %v1119, %v1123
          %vm1125 = vweird.f32 %v1004
          %vm1126 = vweird.f32 %v1119
          %vm1127 = vmor %vm1125, %vm1126
          %v1128 = vsel %vm1127, %v1119, %v1124
          %v1129 = vrsqrt.pop %v1005
          %v1130 = vmul.f32 %v1129, %v1005
          %v1131 = vmul.f32 %v1130, %v1129
          %v1132 = vmul.f32 0.5, %v1131
          %v1133 = vsub.f32 1.5, %v1132
          %v1134 = vmul.f32 %v1129, %v1133
          %vm1135 = vweird.f32 %v1005
          %vm1136 = vweird.f32 %v1129
          %vm1137 = vmor %vm1135, %vm1136
          %v1138 = vsel %vm1137, %v1129, %v1134
          %v1139 = vrsqrt.pop %v1006
          %v1140 = vmul.f32 %v1139, %v1006
          %v1141 = vmul.f32 %v1140, %v1139
          %v1142 = vmul.f32 0.5, %v1141
          %v1143 = vsub.f32 1.5, %v1142
          %v1144 = vmul.f32 %v1139, %v1143
          %vm1145 = vweird.f32 %v1006
          %vm1146 = vweird.f32 %v1139
          %vm1147 = vmor %vm1145, %vm1146
          %v1148 = vsel %vm1147, %v1139, %v1144
          %v1149 = vrsqrt.pop %v1007
          %v1150 = vmul.f32 %v1149, %v1007
          %v1151 = vmul.f32 %v1150, %v1149
          %v1152 = vmul.f32 0.5, %v1151
          %v1153 = vsub.f32 1.5, %v1152
          %v1154 = vmul.f32 %v1149, %v1153
          %vm1155 = vweird.f32 %v1007
          %vm1156 = vweird.f32 %v1149
          %vm1157 = vmor %vm1155, %vm1156
          %v1158 = vsel %vm1157, %v1149, %v1154
          %v1159 = vrsqrt.pop %v1008
          %v1160 = vmul.f32 %v1159, %v1008
          %v1161 = vmul.f32 %v1160, %v1159
          %v1162 = vmul.f32 0.5, %v1161
          %v1163 = vsub.f32 1.5, %v1162
          %v1164 = vmul.f32 %v1159, %v1163
          %vm1165 = vweird.f32 %v1008
          %vm1166 = vweird.f32 %v1159
          %vm1167 = vmor %vm1165, %vm1166
          %v1168 = vsel %vm1167, %v1159, %v1164
          %v1169 = vld [vmem:[%s274] sm:$0xff]
          %v1170 = vld [vmem:[%s274 + $0x8] sm:$0xff]
          %v1171 = vld [vmem:[%s274 + $0x10] sm:$0xff]
          %v1172 = vld [vmem:[%s274 + $0x18] sm:$0xff]
          %v1173 = vld [vmem:[%s274 + $0x20] sm:$0xff]
          %v1174 = vld [vmem:[%s274 + $0x28] sm:$0xff]
          %v1175 = vld [vmem:[%s274 + $0x30] sm:$0xff]
          %v1176 = vld [vmem:[%s274 + $0x38] sm:$0xff]
          %v1177 = vld [vmem:[%s274 + $0x40] sm:$0xff]
          %v1178 = vld [vmem:[%s274 + $0x48] sm:$0xff]
          %v1179 = vld [vmem:[%s274 + $0x50] sm:$0xff]
          %v1180 = vld [vmem:[%s274 + $0x58] sm:$0xff]
          %v1181 = vld [vmem:[%s274 + $0x60] sm:$0xff]
          %v1182 = vld [vmem:[%s274 + $0x68] sm:$0xff]
          %v1183 = vld [vmem:[%s274 + $0x70] sm:$0xff]
          %v1184 = vld [vmem:[%s274 + $0x78] sm:$0xff]
          %v1185 = vmul.f32 %v1169, %v1018
          %v1186 = vmul.f32 %v1170, %v1028
          %v1187 = vmul.f32 %v1171, %v1038
          %v1188 = vmul.f32 %v1172, %v1048
          %v1189 = vmul.f32 %v1173, %v1058
          %v1190 = vmul.f32 %v1174, %v1068
          %v1191 = vmul.f32 %v1175, %v1078
          %v1192 = vmul.f32 %v1176, %v1088
          %v1193 = vmul.f32 %v1177, %v1098
          %v1194 = vmul.f32 %v1178, %v1108
          %v1195 = vmul.f32 %v1179, %v1118
          %v1196 = vmul.f32 %v1180, %v1128
          %v1197 = vmul.f32 %v1181, %v1138
          %v1198 = vmul.f32 %v1182, %v1148
          %v1199 = vmul.f32 %v1183, %v1158
          %v1200 = vmul.f32 %v1184, %v1168
          %v1201 = vmul.f32 %v833, %v1185
          %v1202 = vmul.f32 %v834, %v1186
          %v1203 = vmul.f32 %v835, %v1187
          %v1204 = vmul.f32 %v836, %v1188
          %v1205 = vmul.f32 %v837, %v1189
          %v1206 = vmul.f32 %v838, %v1190
          %v1207 = vmul.f32 %v839, %v1191
          %v1208 = vmul.f32 %v840, %v1192
          %v1209 = vmul.f32 %v841, %v1193
          %v1210 = vmul.f32 %v842, %v1194
          %v1211 = vmul.f32 %v843, %v1195
          %v1212 = vmul.f32 %v844, %v1196
          %v1213 = vmul.f32 %v845, %v1197
          %v1214 = vmul.f32 %v846, %v1198
          %v1215 = vmul.f32 %v847, %v1199
          %v1216 = vmul.f32 %v848, %v1200
          %1233 = vrot.lane.b32.xlu0 %v1201, 1
          %v1234 = vpop.permute.xlu0 %1233
          %1235 = vrot.lane.b32.xlu0 %v1202, 1
          %v1236 = vpop.permute.xlu0 %1235
          %1237 = vrot.lane.b32.xlu0 %v1203, 1
          %v1238 = vpop.permute.xlu0 %1237
          %1239 = vrot.lane.b32.xlu0 %v1204, 1
          %v1240 = vpop.permute.xlu0 %1239
          %1241 = vrot.lane.b32.xlu0 %v1205, 1
          %v1242 = vpop.permute.xlu0 %1241
          %1243 = vrot.lane.b32.xlu0 %v1206, 1
          %v1244 = vpop.permute.xlu0 %1243
          %1245 = vrot.lane.b32.xlu0 %v1207, 1
          %v1246 = vpop.permute.xlu0 %1245
          %1247 = vrot.lane.b32.xlu0 %v1208, 1
          %v1248 = vpop.permute.xlu0 %1247
          %1249 = vrot.lane.b32.xlu0 %v1209, 1
          %v1250 = vpop.permute.xlu0 %1249
          %1251 = vrot.lane.b32.xlu0 %v1210, 1
          %v1252 = vpop.permute.xlu0 %1251
          %1253 = vrot.lane.b32.xlu0 %v1211, 1
          %v1254 = vpop.permute.xlu0 %1253
          %1255 = vrot.lane.b32.xlu0 %v1212, 1
          %v1256 = vpop.permute.xlu0 %1255
          %1257 = vrot.lane.b32.xlu0 %v1213, 1
          %v1258 = vpop.permute.xlu0 %1257
          %1259 = vrot.lane.b32.xlu0 %v1214, 1
          %v1260 = vpop.permute.xlu0 %1259
          %1261 = vrot.lane.b32.xlu0 %v1215, 1
          %v1262 = vpop.permute.xlu0 %1261
          %1263 = vrot.lane.b32.xlu0 %v1216, 1
          %v1264 = vpop.permute.xlu0 %1263
          %v1281 = vsub.f32 %v1169, %v1234
          %v1282 = vsub.f32 %v1170, %v1236
          %v1283 = vsub.f32 %v1171, %v1238
          %v1284 = vsub.f32 %v1172, %v1240
          %v1285 = vsub.f32 %v1173, %v1242
          %v1286 = vsub.f32 %v1174, %v1244
          %v1287 = vsub.f32 %v1175, %v1246
          %v1288 = vsub.f32 %v1176, %v1248
          %v1289 = vsub.f32 %v1177, %v1250
          %v1290 = vsub.f32 %v1178, %v1252
          %v1291 = vsub.f32 %v1179, %v1254
          %v1292 = vsub.f32 %v1180, %v1256
          %v1293 = vsub.f32 %v1181, %v1258
          %v1294 = vsub.f32 %v1182, %v1260
          %v1295 = vsub.f32 %v1183, %v1262
          %v1296 = vsub.f32 %v1184, %v1264
          %1298 = vset.pattern.permute.xlu0 0
          %1299 = vperm.xlu0 %1298, %v1185
          %v1300 = vpop.permute.xlu0 %1299
          %1303 = vset.pattern.permute.xlu0 0
          %1304 = vperm.xlu0 %1303, %v1186
          %v1305 = vpop.permute.xlu0 %1304
          %1308 = vset.pattern.permute.xlu0 0
          %1309 = vperm.xlu0 %1308, %v1187
          %v1310 = vpop.permute.xlu0 %1309
          %1313 = vset.pattern.permute.xlu0 0
          %1314 = vperm.xlu0 %1313, %v1188
          %v1315 = vpop.permute.xlu0 %1314
          %1318 = vset.pattern.permute.xlu0 0
          %1319 = vperm.xlu0 %1318, %v1189
          %v1320 = vpop.permute.xlu0 %1319
          %1323 = vset.pattern.permute.xlu0 0
          %1324 = vperm.xlu0 %1323, %v1190
          %v1325 = vpop.permute.xlu0 %1324
          %1328 = vset.pattern.permute.xlu0 0
          %1329 = vperm.xlu0 %1328, %v1191
          %v1330 = vpop.permute.xlu0 %1329
          %1333 = vset.pattern.permute.xlu0 0
          %1334 = vperm.xlu0 %1333, %v1192
          %v1335 = vpop.permute.xlu0 %1334
          %1338 = vset.pattern.permute.xlu0 0
          %1339 = vperm.xlu0 %1338, %v1193
          %v1340 = vpop.permute.xlu0 %1339
          %1343 = vset.pattern.permute.xlu0 0
          %1344 = vperm.xlu0 %1343, %v1194
          %v1345 = vpop.permute.xlu0 %1344
          %1348 = vset.pattern.permute.xlu0 0
          %1349 = vperm.xlu0 %1348, %v1195
          %v1350 = vpop.permute.xlu0 %1349
          %1353 = vset.pattern.permute.xlu0 0
          %1354 = vperm.xlu0 %1353, %v1196
          %v1355 = vpop.permute.xlu0 %1354
          %1358 = vset.pattern.permute.xlu0 0
          %1359 = vperm.xlu0 %1358, %v1197
          %v1360 = vpop.permute.xlu0 %1359
          %1363 = vset.pattern.permute.xlu0 0
          %1364 = vperm.xlu0 %1363, %v1198
          %v1365 = vpop.permute.xlu0 %1364
          %1368 = vset.pattern.permute.xlu0 0
          %1369 = vperm.xlu0 %1368, %v1199
          %v1370 = vpop.permute.xlu0 %1369
          %1373 = vset.pattern.permute.xlu0 0
          %1374 = vperm.xlu0 %1373, %v1200
          %v1375 = vpop.permute.xlu0 %1374
          %v1377 = vmul.f32 %v753, %v1300
          %v1378 = vmul.f32 %v754, %v1300
          %v1379 = vmul.f32 %v755, %v1305
          %v1380 = vmul.f32 %v756, %v1305
          %v1381 = vmul.f32 %v757, %v1310
          %v1382 = vmul.f32 %v758, %v1310
          %v1383 = vmul.f32 %v759, %v1315
          %v1384 = vmul.f32 %v760, %v1315
          %v1385 = vmul.f32 %v761, %v1320
          %v1386 = vmul.f32 %v762, %v1320
          %v1387 = vmul.f32 %v763, %v1325
          %v1388 = vmul.f32 %v764, %v1325
          %v1389 = vmul.f32 %v765, %v1330
          %v1390 = vmul.f32 %v766, %v1330
          %v1391 = vmul.f32 %v767, %v1335
          %v1392 = vmul.f32 %v768, %v1335
          %v1393 = vmul.f32 %v769, %v1340
          %v1394 = vmul.f32 %v770, %v1340
          %v1395 = vmul.f32 %v771, %v1345
          %v1396 = vmul.f32 %v772, %v1345
          %v1397 = vmul.f32 %v773, %v1350
          %v1398 = vmul.f32 %v774, %v1350
          %v1399 = vmul.f32 %v775, %v1355
          %v1400 = vmul.f32 %v776, %v1355
          %v1401 = vmul.f32 %v777, %v1360
          %v1402 = vmul.f32 %v778, %v1360
          %v1403 = vmul.f32 %v779, %v1365
          %v1404 = vmul.f32 %v780, %v1365
          %v1405 = vmul.f32 %v781, %v1370
          %v1406 = vmul.f32 %v782, %v1370
          %v1407 = vmul.f32 %v783, %v1375
          %v1408 = vmul.f32 %v784, %v1375
          %1410 = vset.pattern.permute.xlu0 1
          %1411 = vperm.xlu0 %1410, %v1281
          %v1412 = vpop.permute.xlu0 %1411
          %1415 = vset.pattern.permute.xlu0 1
          %1416 = vperm.xlu0 %1415, %v1282
          %v1417 = vpop.permute.xlu0 %1416
          %1420 = vset.pattern.permute.xlu0 1
          %1421 = vperm.xlu0 %1420, %v1283
          %v1422 = vpop.permute.xlu0 %1421
          %1425 = vset.pattern.permute.xlu0 1
          %1426 = vperm.xlu0 %1425, %v1284
          %v1427 = vpop.permute.xlu0 %1426
          %1430 = vset.pattern.permute.xlu0 1
          %1431 = vperm.xlu0 %1430, %v1285
          %v1432 = vpop.permute.xlu0 %1431
          %1435 = vset.pattern.permute.xlu0 1
          %1436 = vperm.xlu0 %1435, %v1286
          %v1437 = vpop.permute.xlu0 %1436
          %1440 = vset.pattern.permute.xlu0 1
          %1441 = vperm.xlu0 %1440, %v1287
          %v1442 = vpop.permute.xlu0 %1441
          %1445 = vset.pattern.permute.xlu0 1
          %1446 = vperm.xlu0 %1445, %v1288
          %v1447 = vpop.permute.xlu0 %1446
          %1450 = vset.pattern.permute.xlu0 1
          %1451 = vperm.xlu0 %1450, %v1289
          %v1452 = vpop.permute.xlu0 %1451
          %1455 = vset.pattern.permute.xlu0 1
          %1456 = vperm.xlu0 %1455, %v1290
          %v1457 = vpop.permute.xlu0 %1456
          %1460 = vset.pattern.permute.xlu0 1
          %1461 = vperm.xlu0 %1460, %v1291
          %v1462 = vpop.permute.xlu0 %1461
          %1465 = vset.pattern.permute.xlu0 1
          %1466 = vperm.xlu0 %1465, %v1292
          %v1467 = vpop.permute.xlu0 %1466
          %1470 = vset.pattern.permute.xlu0 1
          %1471 = vperm.xlu0 %1470, %v1293
          %v1472 = vpop.permute.xlu0 %1471
          %1475 = vset.pattern.permute.xlu0 1
          %1476 = vperm.xlu0 %1475, %v1294
          %v1477 = vpop.permute.xlu0 %1476
          %1480 = vset.pattern.permute.xlu0 1
          %1481 = vperm.xlu0 %1480, %v1295
          %v1482 = vpop.permute.xlu0 %1481
          %1485 = vset.pattern.permute.xlu0 1
          %1486 = vperm.xlu0 %1485, %v1296
          %v1487 = vpop.permute.xlu0 %1486
          %v1489 = vadd.f32 %v1377, %v1412
          %v1490 = vadd.f32 %v1378, %v1412
          %v1491 = vadd.f32 %v1379, %v1417
          %v1492 = vadd.f32 %v1380, %v1417
          %v1493 = vadd.f32 %v1381, %v1422
          %v1494 = vadd.f32 %v1382, %v1422
          %v1495 = vadd.f32 %v1383, %v1427
          %v1496 = vadd.f32 %v1384, %v1427
          %v1497 = vadd.f32 %v1385, %v1432
          %v1498 = vadd.f32 %v1386, %v1432
          %v1499 = vadd.f32 %v1387, %v1437
          %v1500 = vadd.f32 %v1388, %v1437
          %v1501 = vadd.f32 %v1389, %v1442
          %v1502 = vadd.f32 %v1390, %v1442
          %v1503 = vadd.f32 %v1391, %v1447
          %v1504 = vadd.f32 %v1392, %v1447
          %v1505 = vadd.f32 %v1393, %v1452
          %v1506 = vadd.f32 %v1394, %v1452
          %v1507 = vadd.f32 %v1395, %v1457
          %v1508 = vadd.f32 %v1396, %v1457
          %v1509 = vadd.f32 %v1397, %v1462
          %v1510 = vadd.f32 %v1398, %v1462
          %v1511 = vadd.f32 %v1399, %v1467
          %v1512 = vadd.f32 %v1400, %v1467
          %v1513 = vadd.f32 %v1401, %v1472
          %v1514 = vadd.f32 %v1402, %v1472
          %v1515 = vadd.f32 %v1403, %v1477
          %v1516 = vadd.f32 %v1404, %v1477
          %v1517 = vadd.f32 %v1405, %v1482
          %v1518 = vadd.f32 %v1406, %v1482
          %v1519 = vadd.f32 %v1407, %v1487
          %v1520 = vadd.f32 %v1408, %v1487
          %v1521 = vmax.f32 %v1489, 0.0
          %v1522 = vmax.f32 %v1490, 0.0
          %v1523 = vmax.f32 %v1491, 0.0
          %v1524 = vmax.f32 %v1492, 0.0
          %v1525 = vmax.f32 %v1493, 0.0
          %v1526 = vmax.f32 %v1494, 0.0
          %v1527 = vmax.f32 %v1495, 0.0
          %v1528 = vmax.f32 %v1496, 0.0
          %v1529 = vmax.f32 %v1497, 0.0
          %v1530 = vmax.f32 %v1498, 0.0
          %v1531 = vmax.f32 %v1499, 0.0
          %v1532 = vmax.f32 %v1500, 0.0
          %v1533 = vmax.f32 %v1501, 0.0
          %v1534 = vmax.f32 %v1502, 0.0
          %v1535 = vmax.f32 %v1503, 0.0
          %v1536 = vmax.f32 %v1504, 0.0
          %v1537 = vmax.f32 %v1505, 0.0
          %v1538 = vmax.f32 %v1506, 0.0
          %v1539 = vmax.f32 %v1507, 0.0
          %v1540 = vmax.f32 %v1508, 0.0
          %v1541 = vmax.f32 %v1509, 0.0
          %v1542 = vmax.f32 %v1510, 0.0
          %v1543 = vmax.f32 %v1511, 0.0
          %v1544 = vmax.f32 %v1512, 0.0
          %v1545 = vmax.f32 %v1513, 0.0
          %v1546 = vmax.f32 %v1514, 0.0
          %v1547 = vmax.f32 %v1515, 0.0
          %v1548 = vmax.f32 %v1516, 0.0
          %v1549 = vmax.f32 %v1517, 0.0
          %v1550 = vmax.f32 %v1518, 0.0
          %v1551 = vmax.f32 %v1519, 0.0
          %v1552 = vmax.f32 %v1520, 0.0
          %1553 = vst [vmem:[%s266] sm:$0xff] %v1521
          %1554 = vst [vmem:[%s266 + $0x8] sm:$0xff] %v1522
          %1555 = vst [vmem:[%s266 + $0x10] sm:$0xff] %v1523
          %1556 = vst [vmem:[%s266 + $0x18] sm:$0xff] %v1524
          %1557 = vst [vmem:[%s266 + $0x20] sm:$0xff] %v1525
          %1558 = vst [vmem:[%s266 + $0x28] sm:$0xff] %v1526
          %1559 = vst [vmem:[%s266 + $0x30] sm:$0xff] %v1527
          %1560 = vst [vmem:[%s266 + $0x38] sm:$0xff] %v1528
          %1561 = vst [vmem:[%s266 + $0x40] sm:$0xff] %v1529
          %1562 = vst [vmem:[%s266 + $0x48] sm:$0xff] %v1530
          %1563 = vst [vmem:[%s266 + $0x50] sm:$0xff] %v1531
          %1564 = vst [vmem:[%s266 + $0x58] sm:$0xff] %v1532
          %1565 = vst [vmem:[%s266 + $0x60] sm:$0xff] %v1533
          %1566 = vst [vmem:[%s266 + $0x68] sm:$0xff] %v1534
          %1567 = vst [vmem:[%s266 + $0x70] sm:$0xff] %v1535
          %1568 = vst [vmem:[%s266 + $0x78] sm:$0xff] %v1536
          %1569 = vst [vmem:[%s266 + $0x80] sm:$0xff] %v1537
          %1570 = vst [vmem:[%s266 + $0x88] sm:$0xff] %v1538
          %1571 = vst [vmem:[%s266 + $0x90] sm:$0xff] %v1539
          %1572 = vst [vmem:[%s266 + $0x98] sm:$0xff] %v1540
          %1573 = vst [vmem:[%s266 + $0xa0] sm:$0xff] %v1541
          %1574 = vst [vmem:[%s266 + $0xa8] sm:$0xff] %v1542
          %1575 = vst [vmem:[%s266 + $0xb0] sm:$0xff] %v1543
          %1576 = vst [vmem:[%s266 + $0xb8] sm:$0xff] %v1544
          %1577 = vst [vmem:[%s266 + $0xc0] sm:$0xff] %v1545
          %1578 = vst [vmem:[%s266 + $0xc8] sm:$0xff] %v1546
          %1579 = vst [vmem:[%s266 + $0xd0] sm:$0xff] %v1547
          %1580 = vst [vmem:[%s266 + $0xd8] sm:$0xff] %v1548
          %1581 = vst [vmem:[%s266 + $0xe0] sm:$0xff] %v1549
          %1582 = vst [vmem:[%s266 + $0xe8] sm:$0xff] %v1550
          %1583 = vst [vmem:[%s266 + $0xf0] sm:$0xff] %v1551
          %1584 = vst [vmem:[%s266 + $0xf8] sm:$0xff] %v1552
        $region48: #{tpu_custom_call.1} parent=31 // pred_fallthru
          _
        %s1585 = sand.u32 %s123, 1
        %s1586 = scalar_lea.sflag [#allocation5], %s1585
        %s1587 = sand.u32 %s123, 1
        %s1588 = smul.addr %s1587, 256
        %s1589 = scalar_lea.vmem [#allocation8], %s1588
        // Predicated region
        $region49: #{tpu_custom_call.1} parent=31 // pred_check
          %p1590 = pneg %p133
        $region50: #{tpu_custom_call.1} parent=31 // pred_check_branch
          %1592 = sbr.rel (%p1590) target = $region52
        $region51: #{tpu_custom_call.1} parent=31 // pred_region
          %s1593 = smul.u32 16, %s27
          %1595 = vsyncadd %s1586, 0
          %s1596 = smul.addr %s1593, 2
          %s1597 = smul.addr %s1596, 8
          %s1598 = scalar_lea.hbm %s3, %s1597
          %s1599 = sshll.u32 %s1589, 4
          %s1600 = int_to_ptr.vmem [resolvable:$true] %s1599
          %s1601 = sshll.u32 %s1598, 4
          %s1602 = int_to_ptr.hbm [resolvable:$true] %s1601
          %1607 = dma.vmem_to_hbm [thread:$0]  %s1600, 4096, %s1602, %s1586, 256, 256, 16
        $region52: #{tpu_custom_call.1} parent=31 // pred_fallthru
          _
      $region32: #{tpu_custom_call.1} parent=5 // pred_fallthru
        _
      %p1608 = scmp.le.s32.totalorder 2, %s18
      // Predicated region
      $region53: #{tpu_custom_call.1} parent=5 // pred_check
        %p1609 = pneg %p1608
      $region54: #{tpu_custom_call.1} parent=5 // pred_check_branch
        %1611 = sbr.rel (%p1609) target = $region56
      $region55: #{tpu_custom_call.1} parent=5 // pred_region
        %s1612 = ssub.s32 %s18, 2
        // Predicated region
        $region57: #{tpu_custom_call.1} parent=55 // pred_check
          %p1613 = pneg %p139
        $region58: #{tpu_custom_call.1} parent=55 // pred_check_branch
          %1615 = sbr.rel (%p1613) target = $region60
        $region59: #{tpu_custom_call.1} parent=55 // pred_region
          %s1616 = sand.u32 %s124, 1
          %s1617 = scalar_lea.sflag [#allocation5], %s1616
          %s1618 = sand.u32 %s124, 1
          %s1619 = smul.addr %s1618, 256
          %s1620 = scalar_lea.vmem [#allocation8], %s1619
          %1622 = dma.done %s1617, 4096
        $region60: #{tpu_custom_call.1} parent=55 // pred_fallthru
          _
      $region56: #{tpu_custom_call.1} parent=5 // pred_fallthru
        _
    $region6: #{tpu_custom_call.1} parent=1 // loop_footer
      %s22 = sadd.s32 1, %s18
    $region7: #{tpu_custom_call.1} parent=1 // loop_footer_branch
      %17 = sbr.rel target = $region3
    $region8: #{tpu_custom_call.1} parent=1 // loop_exit
      _
    %1623 = vsyncpa [#allocation4], 1
    %s1624 = scalar_lea.sflag [#allocation4], 1
    %1625 = vsyncpa %s1624, 1
    %1626 = vsyncpa [#allocation7], 1
    %s1627 = scalar_lea.sflag [#allocation7], 1
    %1628 = vsyncpa %s1627, 1
    %1629 = vsyncpa [#allocation5], 1
    %s1630 = scalar_lea.sflag [#allocation5], 1
    %1631 = vsyncpa %s1630, 1

</llo_original>
